<compile_context>
chip_gen: v7x
topology: tpu7x:2x2x1
jax: 0.10.0
libtpu: 0.0.40
codegen_flags: <defaults>
</compile_context>

<pallas_src>
import jax
import jax.numpy as jnp
import numpy as np
from jax.experimental import pallas as pl
from jax.experimental.pallas import tpu as pltpu


def mhsa_kernel(xT_ref, wq_ref, wk_ref, wv_ref, wo_ref, b_ref, o_ref):
    """One batch element per grid step.

    xT_ref : (1, C, N) bf16   activations, pre-transposed & pre-cast in wrapper
    wq_ref : (C, C)    bf16   q weight rows (head-major), softmax scale folded in
    wk_ref : (C, C)    bf16   k weight rows (head-major)
    wv_ref : (C, C)    bf16   v weight rows (head-major)
    wo_ref : (H, Dh, C) bf16  proj weight, input features split per head
    b_ref  : (1, C)    f32    proj bias
    o_ref  : (1, N, C)        output block
    """
    H, Dh, C = wo_ref.shape
    xT = xT_ref[0]                                   # (C, N) bf16
    N = xT.shape[1]

    # ---- Fused, lane-dense q/k/v projections (the bulk of the FLOPs) ------
    # (C, C) @ (C, N): full-C contraction depth, head-major rows on sublanes.
    qT = jnp.dot(wq_ref[...], xT, preferred_element_type=jnp.float32)   # (C, N) f32
    kT = jnp.dot(wk_ref[...], xT, preferred_element_type=jnp.float32)   # (C, N) f32
    vT = jnp.dot(wv_ref[...], xT, preferred_element_type=jnp.float32)   # (C, N) f32
    kT_b = kT.astype(jnp.bfloat16)                   # K stays pre-transposed
    vT_b = vT.astype(jnp.bfloat16)                   # V stays pre-transposed

    # ---- Attention + output projection, accumulated over heads ------------
    # Each head is a full-width static sublane slice of the (C, N) projections
    # (no lane slicing, no batched-3D relayouts).  H is static -> unrolled.
    acc = jnp.zeros((N, C), jnp.float32)
    for h in range(H):
        lo = h * Dh
        qT_h = qT[lo:lo + Dh, :]                             # (Dh, N) f32
        q_h = qT_h.T.astype(jnp.bfloat16)                    # (N, Dh) 2-D minor transpose
        kT_h = kT_b[lo:lo + Dh, :]                           # (Dh, N) bf16
        vT_h = vT_b[lo:lo + Dh, :]                           # (Dh, N) bf16

        # Scores (softmax scale already folded into wq), f32 MXU accumulation.
        s = jnp.dot(q_h, kT_h, preferred_element_type=jnp.float32)      # (N, N)

        # Un-normalized softmax in f32 (VPU/EUP); normalization deferred.
        p = jnp.exp(s - jnp.max(s, axis=-1, keepdims=True))
        l = jnp.sum(p, axis=-1, keepdims=True)                           # (N, 1)

        # P @ V as a trans-B contraction against the already-transposed V.
        o_h = jnp.einsum('nm,dm->nd', p.astype(jnp.bfloat16), vT_h,
                         preferred_element_type=jnp.float32)             # (N, Dh)

        # Deferred softmax normalization on the small (N, Dh) tile.
        o_h = (o_h * pl.reciprocal(l, approx=True)).astype(jnp.bfloat16)

        # Per-head slab of the output projection accumulated into one
        # lane-dense (N, C) buffer: sum_h o_h @ Wproj[h] == concat(o) @ Wproj.
        acc = acc + jnp.dot(o_h, wo_ref[h], preferred_element_type=jnp.float32)

    o_ref[0] = (acc + b_ref[...]).astype(o_ref.dtype)


def mhsa_forward(x, wqkv_pt, wproj_pt, bproj, *, num_heads, qk_scale=None):
    """x: (B, N, C) float32.  Weights in PyTorch nn.Linear layout:
    wqkv_pt: (3C, C), wproj_pt: (C, C), bproj: (C,)."""
    B, N, C = x.shape
    H = num_heads
    Dh = C // H
    scale = qk_scale if qk_scale is not None else Dh ** (-0.5)

    # PyTorch qkv rows are ordered [q|k|v] x (head-major h, d); we use W (not
    # W.T) directly because the kernel computes W @ x.T.  Scale folded into q.
    wq = (wqkv_pt[:C] * scale).astype(jnp.bfloat16)          # (C, C)
    wk = wqkv_pt[C:2 * C].astype(jnp.bfloat16)               # (C, C)
    wv = wqkv_pt[2 * C:].astype(jnp.bfloat16)                # (C, C)
    # proj: out = concat_heads(o) @ wproj_pt.T + b ; split input features per head.
    wo = wproj_pt.T.reshape(H, Dh, C).astype(jnp.bfloat16)   # (H, Dh, C)
    b2 = bproj.reshape(1, C).astype(jnp.float32)

    # Pre-transpose + pre-cast activations: half the input DMA, no in-kernel cast.
    xT = jnp.swapaxes(x, 1, 2).astype(jnp.bfloat16)          # (B, C, N)

    return pl.pallas_call(
        mhsa_kernel,
        out_shape=jax.ShapeDtypeStruct((B, N, C), x.dtype),
        grid_spec=pltpu.PrefetchScalarGridSpec(
            num_scalar_prefetch=0,
            grid=(B,),
            in_specs=[
                pl.BlockSpec((1, C, N), lambda b: (b, 0, 0)),
                pl.BlockSpec((C, C), lambda b: (0, 0)),
                pl.BlockSpec((C, C), lambda b: (0, 0)),
                pl.BlockSpec((C, C), lambda b: (0, 0)),
                pl.BlockSpec((H, Dh, C), lambda b: (0, 0, 0)),
                pl.BlockSpec((1, C), lambda b: (0, 0)),
            ],
            out_specs=pl.BlockSpec((1, N, C), lambda b: (b, 0, 0)),
        ),
        compiler_params=pltpu.CompilerParams(
            dimension_semantics=("parallel",),
            vmem_limit_bytes=48 * 1024 * 1024,
        ),
    )(xT, wq, wk, wv, wo, b2)


def mhsa_reference(x, wqkv_pt, wproj_pt, bproj, *, num_heads, qk_scale=None):
    """Pure-JAX f32 reference matching the PyTorch forward exactly."""
    B, N, C = x.shape
    H = num_heads
    Dh = C // H
    scale = qk_scale if qk_scale is not None else Dh ** (-0.5)
    qkv = x @ wqkv_pt.T                                      # (B, N, 3C)
    qkv = qkv.reshape(B, N, 3, H, Dh).transpose(2, 0, 3, 1, 4)
    q, k, v = qkv[0], qkv[1], qkv[2]                         # (B, H, N, Dh)
    attn = jnp.einsum('bhnd,bhmd->bhnm', q, k) * scale
    attn = jax.nn.softmax(attn, axis=-1)
    out = jnp.einsum('bhnm,bhmd->bhnd', attn, v)
    out = out.transpose(0, 2, 1, 3).reshape(B, N, C)
    return out @ wproj_pt.T + bproj


def trunc_normal(key, shape, std=0.02):
    return std * jax.random.truncated_normal(key, -2.0, 2.0, shape, jnp.float32)


if __name__ == "__main__":
    # Small, module-consistent shapes: B=2, N=16 tokens, C=64 dim, 4 heads (Dh=16).
    B, N, C, num_heads = 2, 16, 64, 4

    key = jax.random.PRNGKey(0)
    kx, kq, kp = jax.random.split(key, 3)

    x = jax.random.normal(kx, (B, N, C), jnp.float32)

    # PyTorch nn.Linear layout: weight (out, in); qkv_bias=False; proj bias = 0.
    wqkv_pt = trunc_normal(kq, (3 * C, C))
    wproj_pt = trunc_normal(kp, (C, C))
    bproj = jnp.zeros((C,), jnp.float32)

    out = mhsa_forward(x, wqkv_pt, wproj_pt, bproj, num_heads=num_heads)
    out = jax.block_until_ready(out)

    ref = mhsa_reference(x, wqkv_pt, wproj_pt, bproj, num_heads=num_heads)
    # bf16 MXU operands + approx reciprocal -> relaxed (but still tight) tolerance.
    np.testing.assert_allclose(np.asarray(out), np.asarray(ref),
                               rtol=5e-2, atol=2e-3)

    print("KERNEL_OK")
</pallas_src>

<mosaic_0001>
module attributes {stable_mosaic.version = 11 : i64} {
  func.func @mhsa_kernel(%arg0: i32, %arg1: memref<1x64x16xbf16, #tpu.memory_space<vmem>>, %arg2: memref<64x64xbf16, #tpu.memory_space<vmem>>, %arg3: memref<64x64xbf16, #tpu.memory_space<vmem>>, %arg4: memref<64x64xbf16, #tpu.memory_space<vmem>>, %arg5: memref<4x16x64xbf16, #tpu.memory_space<vmem>>, %arg6: memref<1x64xf32, #tpu.memory_space<vmem>>, %arg7: memref<1x16x64xf32, #tpu.memory_space<vmem>>) attributes {dimension_semantics = [#tpu.dimension_semantics<parallel>], iteration_bounds = array<i64: 2>, scalar_prefetch = 0 : i64, scratch_operands = 0 : i64, tpu.core_type = #tpu.core_type<tc>, window_params = [{transform_indices = @transform_0, window_bounds = array<i64: 1, 64, 16>}, {pipeline_mode = #tpu.pipeline_mode<synchronous>, transform_indices = @transform_1, window_bounds = array<i64: 64, 64>}, {pipeline_mode = #tpu.pipeline_mode<synchronous>, transform_indices = @transform_2, window_bounds = array<i64: 64, 64>}, {pipeline_mode = #tpu.pipeline_mode<synchronous>, transform_indices = @transform_3, window_bounds = array<i64: 64, 64>}, {pipeline_mode = #tpu.pipeline_mode<synchronous>, transform_indices = @transform_4, window_bounds = array<i64: 4, 16, 64>}, {pipeline_mode = #tpu.pipeline_mode<synchronous>, transform_indices = @transform_5, window_bounds = array<i64: 1, 64>}, {transform_indices = @transform_6, window_bounds = array<i64: 1, 16, 64>}]} {
    %c0 = arith.constant 0 : index
    %c0_0 = arith.constant 0 : index
    %c0_1 = arith.constant 0 : index
    %0 = vector.load %arg1[%c0, %c0_0, %c0_1] : memref<1x64x16xbf16, #tpu.memory_space<vmem>>, vector<1x64x16xbf16>
    %1 = vector.shape_cast %0 : vector<1x64x16xbf16> to vector<64x16xbf16>
    %c0_2 = arith.constant 0 : index
    %c0_3 = arith.constant 0 : index
    %2 = vector.load %arg2[%c0_2, %c0_3] : memref<64x64xbf16, #tpu.memory_space<vmem>>, vector<64x64xbf16>
    %cst = arith.constant dense<0.000000e+00> : vector<64x16xf32>
    %3 = tpu.matmul %2, %1, %cst {dimension_numbers = #tpu.dot_dimension_numbers<[1], [0], [0], [1], [0, 0, 1, 1], [], []>} : vector<64x64xbf16>, vector<64x16xbf16>, vector<64x16xf32> -> vector<64x16xf32>
    %c0_4 = arith.constant 0 : index
    %c0_5 = arith.constant 0 : index
    %4 = vector.load %arg3[%c0_4, %c0_5] : memref<64x64xbf16, #tpu.memory_space<vmem>>, vector<64x64xbf16>
    %cst_6 = arith.constant dense<0.000000e+00> : vector<64x16xf32>
    %5 = tpu.matmul %4, %1, %cst_6 {dimension_numbers = #tpu.dot_dimension_numbers<[1], [0], [0], [1], [0, 0, 1, 1], [], []>} : vector<64x64xbf16>, vector<64x16xbf16>, vector<64x16xf32> -> vector<64x16xf32>
    %c0_7 = arith.constant 0 : index
    %c0_8 = arith.constant 0 : index
    %6 = vector.load %arg4[%c0_7, %c0_8] : memref<64x64xbf16, #tpu.memory_space<vmem>>, vector<64x64xbf16>
    %cst_9 = arith.constant dense<0.000000e+00> : vector<64x16xf32>
    %7 = tpu.matmul %6, %1, %cst_9 {dimension_numbers = #tpu.dot_dimension_numbers<[1], [0], [0], [1], [0, 0, 1, 1], [], []>} : vector<64x64xbf16>, vector<64x16xbf16>, vector<64x16xf32> -> vector<64x16xf32>
    %8 = arith.truncf %5 : vector<64x16xf32> to vector<64x16xbf16>
    %9 = arith.truncf %7 : vector<64x16xf32> to vector<64x16xbf16>
    %cst_10 = arith.constant 0.000000e+00 : f32
    %10 = vector.broadcast %cst_10 : f32 to vector<16x64xf32>
    %11 = vector.extract_strided_slice %3 {offsets = [0, 0], sizes = [16, 16], strides = [1, 1]} : vector<64x16xf32> to vector<16x16xf32>
    %12 = tpu.transpose %11, [1, 0] : vector<16x16xf32> -> vector<16x16xf32>
    %13 = arith.truncf %12 : vector<16x16xf32> to vector<16x16xbf16>
    %14 = vector.extract_strided_slice %8 {offsets = [0, 0], sizes = [16, 16], strides = [1, 1]} : vector<64x16xbf16> to vector<16x16xbf16>
    %15 = vector.extract_strided_slice %9 {offsets = [0, 0], sizes = [16, 16], strides = [1, 1]} : vector<64x16xbf16> to vector<16x16xbf16>
    %cst_11 = arith.constant dense<0.000000e+00> : vector<16x16xf32>
    %16 = tpu.matmul %13, %14, %cst_11 {dimension_numbers = #tpu.dot_dimension_numbers<[1], [0], [0], [1], [0, 0, 1, 1], [], []>} : vector<16x16xbf16>, vector<16x16xbf16>, vector<16x16xf32> -> vector<16x16xf32>
    %cst_12 = arith.constant dense<0xFF800000> : vector<16xf32>
    %17 = vector.multi_reduction <maximumf>, %16, %cst_12 [1] : vector<16x16xf32> to vector<16xf32>
    %18 = vector.shape_cast %17 : vector<16xf32> to vector<16x1xf32>
    %19 = vector.broadcast %18 : vector<16x1xf32> to vector<16x16xf32>
    %20 = arith.subf %16, %19 : vector<16x16xf32>
    %21 = math.exp %20 : vector<16x16xf32>
    %cst_13 = arith.constant dense<0.000000e+00> : vector<16xf32>
    %22 = vector.multi_reduction <add>, %21, %cst_13 [1] : vector<16x16xf32> to vector<16xf32>
    %23 = vector.shape_cast %22 : vector<16xf32> to vector<16x1xf32>
    %24 = arith.truncf %21 : vector<16x16xf32> to vector<16x16xbf16>
    "tpu.trace_start"() <{level = 10 : i32, message = "nm,dm->nd"}> : () -> ()
    %cst_14 = arith.constant dense<0.000000e+00> : vector<16x16xf32>
    %25 = tpu.matmul %24, %15, %cst_14 {dimension_numbers = #tpu.dot_dimension_numbers<[1], [1], [0], [0], [0, 0, 1, 0], [], []>} : vector<16x16xbf16>, vector<16x16xbf16>, vector<16x16xf32> -> vector<16x16xf32>
    "tpu.trace_stop"() : () -> ()
    %26 = tpu.reciprocal %23 {approx = true} : vector<16x1xf32> -> vector<16x1xf32>
    %27 = vector.broadcast %26 : vector<16x1xf32> to vector<16x16xf32>
    %28 = arith.mulf %25, %27 : vector<16x16xf32>
    %29 = arith.truncf %28 : vector<16x16xf32> to vector<16x16xbf16>
    %c0_15 = arith.constant 0 : index
    %c0_16 = arith.constant 0 : index
    %c0_17 = arith.constant 0 : index
    %30 = vector.load %arg5[%c0_15, %c0_16, %c0_17] : memref<4x16x64xbf16, #tpu.memory_space<vmem>>, vector<1x16x64xbf16>
    %31 = vector.shape_cast %30 : vector<1x16x64xbf16> to vector<16x64xbf16>
    %cst_18 = arith.constant dense<0.000000e+00> : vector<16x64xf32>
    %32 = tpu.matmul %29, %31, %cst_18 {dimension_numbers = #tpu.dot_dimension_numbers<[1], [0], [0], [1], [0, 0, 1, 1], [], []>} : vector<16x16xbf16>, vector<16x64xbf16>, vector<16x64xf32> -> vector<16x64xf32>
    %33 = arith.addf %10, %32 : vector<16x64xf32>
    %34 = vector.extract_strided_slice %3 {offsets = [16, 0], sizes = [16, 16], strides = [1, 1]} : vector<64x16xf32> to vector<16x16xf32>
    %35 = tpu.transpose %34, [1, 0] : vector<16x16xf32> -> vector<16x16xf32>
    %36 = arith.truncf %35 : vector<16x16xf32> to vector<16x16xbf16>
    %37 = vector.extract_strided_slice %8 {offsets = [16, 0], sizes = [16, 16], strides = [1, 1]} : vector<64x16xbf16> to vector<16x16xbf16>
    %38 = vector.extract_strided_slice %9 {offsets = [16, 0], sizes = [16, 16], strides = [1, 1]} : vector<64x16xbf16> to vector<16x16xbf16>
    %cst_19 = arith.constant dense<0.000000e+00> : vector<16x16xf32>
    %39 = tpu.matmul %36, %37, %cst_19 {dimension_numbers = #tpu.dot_dimension_numbers<[1], [0], [0], [1], [0, 0, 1, 1], [], []>} : vector<16x16xbf16>, vector<16x16xbf16>, vector<16x16xf32> -> vector<16x16xf32>
    %cst_20 = arith.constant dense<0xFF800000> : vector<16xf32>
    %40 = vector.multi_reduction <maximumf>, %39, %cst_20 [1] : vector<16x16xf32> to vector<16xf32>
    %41 = vector.shape_cast %40 : vector<16xf32> to vector<16x1xf32>
    %42 = vector.broadcast %41 : vector<16x1xf32> to vector<16x16xf32>
    %43 = arith.subf %39, %42 : vector<16x16xf32>
    %44 = math.exp %43 : vector<16x16xf32>
    %cst_21 = arith.constant dense<0.000000e+00> : vector<16xf32>
    %45 = vector.multi_reduction <add>, %44, %cst_21 [1] : vector<16x16xf32> to vector<16xf32>
    %46 = vector.shape_cast %45 : vector<16xf32> to vector<16x1xf32>
    %47 = arith.truncf %44 : vector<16x16xf32> to vector<16x16xbf16>
    "tpu.trace_start"() <{level = 10 : i32, message = "nm,dm->nd"}> : () -> ()
    %cst_22 = arith.constant dense<0.000000e+00> : vector<16x16xf32>
    %48 = tpu.matmul %47, %38, %cst_22 {dimension_numbers = #tpu.dot_dimension_numbers<[1], [1], [0], [0], [0, 0, 1, 0], [], []>} : vector<16x16xbf16>, vector<16x16xbf16>, vector<16x16xf32> -> vector<16x16xf32>
    "tpu.trace_stop"() : () -> ()
    %49 = tpu.reciprocal %46 {approx = true} : vector<16x1xf32> -> vector<16x1xf32>
    %50 = vector.broadcast %49 : vector<16x1xf32> to vector<16x16xf32>
    %51 = arith.mulf %48, %50 : vector<16x16xf32>
    %52 = arith.truncf %51 : vector<16x16xf32> to vector<16x16xbf16>
    %c1 = arith.constant 1 : index
    %c0_23 = arith.constant 0 : index
    %c0_24 = arith.constant 0 : index
    %53 = vector.load %arg5[%c1, %c0_23, %c0_24] : memref<4x16x64xbf16, #tpu.memory_space<vmem>>, vector<1x16x64xbf16>
    %54 = vector.shape_cast %53 : vector<1x16x64xbf16> to vector<16x64xbf16>
    %cst_25 = arith.constant dense<0.000000e+00> : vector<16x64xf32>
    %55 = tpu.matmul %52, %54, %cst_25 {dimension_numbers = #tpu.dot_dimension_numbers<[1], [0], [0], [1], [0, 0, 1, 1], [], []>} : vector<16x16xbf16>, vector<16x64xbf16>, vector<16x64xf32> -> vector<16x64xf32>
    %56 = arith.addf %33, %55 : vector<16x64xf32>
    %57 = vector.extract_strided_slice %3 {offsets = [32, 0], sizes = [16, 16], strides = [1, 1]} : vector<64x16xf32> to vector<16x16xf32>
    %58 = tpu.transpose %57, [1, 0] : vector<16x16xf32> -> vector<16x16xf32>
    %59 = arith.truncf %58 : vector<16x16xf32> to vector<16x16xbf16>
    %60 = vector.extract_strided_slice %8 {offsets = [32, 0], sizes = [16, 16], strides = [1, 1]} : vector<64x16xbf16> to vector<16x16xbf16>
    %61 = vector.extract_strided_slice %9 {offsets = [32, 0], sizes = [16, 16], strides = [1, 1]} : vector<64x16xbf16> to vector<16x16xbf16>
    %cst_26 = arith.constant dense<0.000000e+00> : vector<16x16xf32>
    %62 = tpu.matmul %59, %60, %cst_26 {dimension_numbers = #tpu.dot_dimension_numbers<[1], [0], [0], [1], [0, 0, 1, 1], [], []>} : vector<16x16xbf16>, vector<16x16xbf16>, vector<16x16xf32> -> vector<16x16xf32>
    %cst_27 = arith.constant dense<0xFF800000> : vector<16xf32>
    %63 = vector.multi_reduction <maximumf>, %62, %cst_27 [1] : vector<16x16xf32> to vector<16xf32>
    %64 = vector.shape_cast %63 : vector<16xf32> to vector<16x1xf32>
    %65 = vector.broadcast %64 : vector<16x1xf32> to vector<16x16xf32>
    %66 = arith.subf %62, %65 : vector<16x16xf32>
    %67 = math.exp %66 : vector<16x16xf32>
    %cst_28 = arith.constant dense<0.000000e+00> : vector<16xf32>
    %68 = vector.multi_reduction <add>, %67, %cst_28 [1] : vector<16x16xf32> to vector<16xf32>
    %69 = vector.shape_cast %68 : vector<16xf32> to vector<16x1xf32>
    %70 = arith.truncf %67 : vector<16x16xf32> to vector<16x16xbf16>
    "tpu.trace_start"() <{level = 10 : i32, message = "nm,dm->nd"}> : () -> ()
    %cst_29 = arith.constant dense<0.000000e+00> : vector<16x16xf32>
    %71 = tpu.matmul %70, %61, %cst_29 {dimension_numbers = #tpu.dot_dimension_numbers<[1], [1], [0], [0], [0, 0, 1, 0], [], []>} : vector<16x16xbf16>, vector<16x16xbf16>, vector<16x16xf32> -> vector<16x16xf32>
    "tpu.trace_stop"() : () -> ()
    %72 = tpu.reciprocal %69 {approx = true} : vector<16x1xf32> -> vector<16x1xf32>
    %73 = vector.broadcast %72 : vector<16x1xf32> to vector<16x16xf32>
    %74 = arith.mulf %71, %73 : vector<16x16xf32>
    %75 = arith.truncf %74 : vector<16x16xf32> to vector<16x16xbf16>
    %c2 = arith.constant 2 : index
    %c0_30 = arith.constant 0 : index
    %c0_31 = arith.constant 0 : index
    %76 = vector.load %arg5[%c2, %c0_30, %c0_31] : memref<4x16x64xbf16, #tpu.memory_space<vmem>>, vector<1x16x64xbf16>
    %77 = vector.shape_cast %76 : vector<1x16x64xbf16> to vector<16x64xbf16>
    %cst_32 = arith.constant dense<0.000000e+00> : vector<16x64xf32>
    %78 = tpu.matmul %75, %77, %cst_32 {dimension_numbers = #tpu.dot_dimension_numbers<[1], [0], [0], [1], [0, 0, 1, 1], [], []>} : vector<16x16xbf16>, vector<16x64xbf16>, vector<16x64xf32> -> vector<16x64xf32>
    %79 = arith.addf %56, %78 : vector<16x64xf32>
    %80 = vector.extract_strided_slice %3 {offsets = [48, 0], sizes = [16, 16], strides = [1, 1]} : vector<64x16xf32> to vector<16x16xf32>
    %81 = tpu.transpose %80, [1, 0] : vector<16x16xf32> -> vector<16x16xf32>
    %82 = arith.truncf %81 : vector<16x16xf32> to vector<16x16xbf16>
    %83 = vector.extract_strided_slice %8 {offsets = [48, 0], sizes = [16, 16], strides = [1, 1]} : vector<64x16xbf16> to vector<16x16xbf16>
    %84 = vector.extract_strided_slice %9 {offsets = [48, 0], sizes = [16, 16], strides = [1, 1]} : vector<64x16xbf16> to vector<16x16xbf16>
    %cst_33 = arith.constant dense<0.000000e+00> : vector<16x16xf32>
    %85 = tpu.matmul %82, %83, %cst_33 {dimension_numbers = #tpu.dot_dimension_numbers<[1], [0], [0], [1], [0, 0, 1, 1], [], []>} : vector<16x16xbf16>, vector<16x16xbf16>, vector<16x16xf32> -> vector<16x16xf32>
    %cst_34 = arith.constant dense<0xFF800000> : vector<16xf32>
    %86 = vector.multi_reduction <maximumf>, %85, %cst_34 [1] : vector<16x16xf32> to vector<16xf32>
    %87 = vector.shape_cast %86 : vector<16xf32> to vector<16x1xf32>
    %88 = vector.broadcast %87 : vector<16x1xf32> to vector<16x16xf32>
    %89 = arith.subf %85, %88 : vector<16x16xf32>
    %90 = math.exp %89 : vector<16x16xf32>
    %cst_35 = arith.constant dense<0.000000e+00> : vector<16xf32>
    %91 = vector.multi_reduction <add>, %90, %cst_35 [1] : vector<16x16xf32> to vector<16xf32>
    %92 = vector.shape_cast %91 : vector<16xf32> to vector<16x1xf32>
    %93 = arith.truncf %90 : vector<16x16xf32> to vector<16x16xbf16>
    "tpu.trace_start"() <{level = 10 : i32, message = "nm,dm->nd"}> : () -> ()
    %cst_36 = arith.constant dense<0.000000e+00> : vector<16x16xf32>
    %94 = tpu.matmul %93, %84, %cst_36 {dimension_numbers = #tpu.dot_dimension_numbers<[1], [1], [0], [0], [0, 0, 1, 0], [], []>} : vector<16x16xbf16>, vector<16x16xbf16>, vector<16x16xf32> -> vector<16x16xf32>
    "tpu.trace_stop"() : () -> ()
    %95 = tpu.reciprocal %92 {approx = true} : vector<16x1xf32> -> vector<16x1xf32>
    %96 = vector.broadcast %95 : vector<16x1xf32> to vector<16x16xf32>
    %97 = arith.mulf %94, %96 : vector<16x16xf32>
    %98 = arith.truncf %97 : vector<16x16xf32> to vector<16x16xbf16>
    %c3 = arith.constant 3 : index
    %c0_37 = arith.constant 0 : index
    %c0_38 = arith.constant 0 : index
    %99 = vector.load %arg5[%c3, %c0_37, %c0_38] : memref<4x16x64xbf16, #tpu.memory_space<vmem>>, vector<1x16x64xbf16>
    %100 = vector.shape_cast %99 : vector<1x16x64xbf16> to vector<16x64xbf16>
    %cst_39 = arith.constant dense<0.000000e+00> : vector<16x64xf32>
    %101 = tpu.matmul %98, %100, %cst_39 {dimension_numbers = #tpu.dot_dimension_numbers<[1], [0], [0], [1], [0, 0, 1, 1], [], []>} : vector<16x16xbf16>, vector<16x64xbf16>, vector<16x64xf32> -> vector<16x64xf32>
    %102 = arith.addf %79, %101 : vector<16x64xf32>
    %c0_40 = arith.constant 0 : index
    %c0_41 = arith.constant 0 : index
    %103 = vector.load %arg6[%c0_40, %c0_41] : memref<1x64xf32, #tpu.memory_space<vmem>>, vector<1x64xf32>
    %104 = vector.broadcast %103 : vector<1x64xf32> to vector<16x64xf32>
    %105 = arith.addf %102, %104 : vector<16x64xf32>
    %c0_42 = arith.constant 0 : index
    %c0_43 = arith.constant 0 : index
    %c0_44 = arith.constant 0 : index
    %106 = vector.load %arg7[%c0_42, %c0_43, %c0_44] : memref<1x16x64xf32, #tpu.memory_space<vmem>>, vector<1x16x64xf32>
    %107 = vector.shape_cast %106 : vector<1x16x64xf32> to vector<16x64xf32>
    %108 = vector.shape_cast %105 : vector<16x64xf32> to vector<1x16x64xf32>
    tpu.vector_store %arg7[%c0_42, %c0_43, %c0_44], %108 {strides = array<i32>} : memref<1x16x64xf32, #tpu.memory_space<vmem>>, vector<1x16x64xf32>,
    return
  }
  func.func @transform_0(%arg0: i32) -> (i32, i32, i32) {
    %c0_i32 = arith.constant 0 : i32
    %c0_i32_0 = arith.constant 0 : i32
    %c0_i32_1 = arith.constant 0 : i32
    return %arg0, %c0_i32, %c0_i32_0 : i32, i32, i32
  }
  func.func @transform_1(%arg0: i32) -> (i32, i32) {
    %c0_i32 = arith.constant 0 : i32
    %c0_i32_0 = arith.constant 0 : i32
    %c0_i32_1 = arith.constant 0 : i32
    return %c0_i32, %c0_i32_0 : i32, i32
  }
  func.func @transform_2(%arg0: i32) -> (i32, i32) {
    %c0_i32 = arith.constant 0 : i32
    %c0_i32_0 = arith.constant 0 : i32
    %c0_i32_1 = arith.constant 0 : i32
    return %c0_i32, %c0_i32_0 : i32, i32
  }
  func.func @transform_3(%arg0: i32) -> (i32, i32) {
    %c0_i32 = arith.constant 0 : i32
    %c0_i32_0 = arith.constant 0 : i32
    %c0_i32_1 = arith.constant 0 : i32
    return %c0_i32, %c0_i32_0 : i32, i32
  }
  func.func @transform_4(%arg0: i32) -> (i32, i32, i32) {
    %c0_i32 = arith.constant 0 : i32
    %c0_i32_0 = arith.constant 0 : i32
    %c0_i32_1 = arith.constant 0 : i32
    %c0_i32_2 = arith.constant 0 : i32
    return %c0_i32, %c0_i32_0, %c0_i32_1 : i32, i32, i32
  }
  func.func @transform_5(%arg0: i32) -> (i32, i32) {
    %c0_i32 = arith.constant 0 : i32
    %c0_i32_0 = arith.constant 0 : i32
    %c0_i32_1 = arith.constant 0 : i32
    return %c0_i32, %c0_i32_0 : i32, i32
  }
  func.func @transform_6(%arg0: i32) -> (i32, i32, i32) {
    %c0_i32 = arith.constant 0 : i32
    %c0_i32_0 = arith.constant 0 : i32
    %c0_i32_1 = arith.constant 0 : i32
    return %arg0, %c0_i32, %c0_i32_0 : i32, i32, i32
  }
}

</mosaic_0001>

<llo_original>
// kernel: tpu_custom_call.1
$region0: #{tpu_custom_call.1}
  #allocation0 [shape = 'u32[]', space=smem, size = 0x4, offset = 0x4, fixed_abs, tag = 'smem constant byte address 0x4 - core index']
  #allocation1 [shape = 'u32[144,128]{1,0:T(1,128)}', space=vmem, size = 0x12000, scoped, tag = 'internal scratch']
  %s0 = inlined_call_operand.vmem [shape: bf16[2,64,16], index: 0, kind: input, shape index: {}]
  %s1 = inlined_call_operand.vmem [shape: bf16[64,64], index: 1, kind: input, shape index: {}]
  %s2 = inlined_call_operand.vmem [shape: bf16[64,64], index: 2, kind: input, shape index: {}]
  %s3 = inlined_call_operand.hbm [shape: bf16[64,64], index: 3, kind: input, shape index: {}]
  %s4 = inlined_call_operand.hbm [shape: bf16[4,16,64], index: 4, kind: input, shape index: {}]
  %s5 = inlined_call_operand.vmem [shape: f32[1,64], index: 5, kind: input, shape index: {}]
  %s6 = inlined_call_operand.hbm [shape: f32[2,16,64], index: 6, kind: output, shape index: {}]
  %s7 = sld [smem:[#allocation0]]
  $region65: #{tpu_custom_call.1} parent=0
    _
  %s9 = ssub.s32 1, %s7
  %s10 = scalar_select 0, %s9, %s7
  $region1: #{tpu_custom_call.1} parent=0
    #allocation2 [shape = 'u8[16384]{0}', space=vmem, size = 0x4000, scoped, tag = 'input window, operand 3, single buffered']
    #allocation3 [shape = 's32[2]{0}', space=sflag, size = 0x8, scoped, tag = 'scoped memory for tpu_custom_call.1']
    #allocation4 [shape = 's32[2]{0}', space=sflag, size = 0x8, scoped, tag = 'scoped memory for tpu_custom_call.1']
    #allocation5 [shape = 'u8[16384]{0}', space=vmem, size = 0x4000, scoped, tag = 'input window, operand 4, single buffered']
    #allocation6 [shape = 's32[1]{0}', space=sflag, size = 0x4, scoped, tag = 'scoped memory for tpu_custom_call.1']
    #allocation7 [shape = 'u8[16384]{0}', space=vmem, size = 0x4000, scoped, tag = 'output window, operand 0']
    %11 = vsyncpa [#allocation3], 0
    %12 = vsyncpa [#allocation6], 0
    %13 = vsyncpa [#allocation4], 0
    %s14 = scalar_lea.sflag [#allocation4], 1
    %15 = vsyncpa %s14, 0
    loop: start=0, step=1, limit=4
    $region2: #{tpu_custom_call.1} parent=1 // loop_pre_header
      _
    $region3: #{tpu_custom_call.1} parent=1 // loop_header
      %s17 = sphi 0, %s21
      %p18 = scmp.ge.s32.totalorder %s17, 4
      %s27 = sphi 0, %s29
      %s30 = sphi 0, %s27
      %s31 = sphi 0, %s30
      %s47 = sphi 0, %s31
      %s51 = sphi 0, %s51
      %s53 = sphi 0, %s51
      %s54 = sphi 0, %s53
      %s68 = sphi 0, %s54
      %s72 = sphi 0, %s72
      %s74 = sphi 0, %s72
      %s75 = sphi 0, %s74
      %s89 = sphi 0, %s75
      %s93 = sphi 0, %s93
      %s95 = sphi 0, %s93
      %s96 = sphi 0, %s95
      %s110 = sphi 0, %s96
      %s114 = sphi 0, %s114
      %s116 = sphi 0, %s114
      %s117 = sphi 0, %s116
      %s131 = sphi 0, %s117
      %s135 = sphi 0, %s135
      %s137 = sphi 0, %s135
      %s138 = sphi 0, %s137
      %s152 = sphi 0, %s138
      %s158 = sphi 0, %s160
      %s161 = sphi 0, %s158
      %s162 = sphi 0, %s161
      %s178 = sphi 0, %s162
    $region4: #{tpu_custom_call.1} parent=1 // loop_header_branch
      %20 = sbr.rel (%p18) target = $region8
    $region5: #{tpu_custom_call.1} parent=1 // loop_body
      %s22 = ssub.s32 %s17, 1
      %s23 = ssub.s32 %s17, 2
      %s24 = sadd.s32 %s17, 1
      %s25 = ssub.s32 %s17, %s24
      %p26 = scmp.eq.s32.totalorder %s25, 0
      %s28 = sadd.s32 %s27, 1
      %s29 = scalar_select %p26, %s27, %s28
      %p32 = pneg %p26
      %p33 = scmp.eq.s32.totalorder %s17, 1
      %p34 = por %p32, %p33
      %p35 = scmp.ne.s32.totalorder %s27, %s30
      %p36 = scmp.eq.s32.totalorder %s17, 0
      %p37 = por %p35, %p36
      %p38 = scmp.ne.s32.totalorder %s27, %s30
      %p39 = scmp.eq.s32.totalorder %s22, 1
      %p40 = por %p38, %p39
      %p41 = scmp.ne.s32.totalorder %s30, %s31
      %p42 = scmp.eq.s32.totalorder %s22, 0
      %p43 = por %p41, %p42
      %p44 = scmp.ne.s32.totalorder %s30, %s31
      %p45 = scmp.eq.s32.totalorder %s23, 1
      %p46 = por %p44, %p45
      %p48 = scmp.ne.s32.totalorder %s31, %s47
      %p49 = scmp.eq.s32.totalorder %s23, 0
      %p50 = por %p48, %p49
      %s52 = sadd.s32 %s51, 1
      %p55 = scmp.eq.s32.totalorder %s17, 1
      %p56 = scmp.ne.s32.totalorder %s51, %s53
      %p57 = scmp.eq.s32.totalorder %s17, 0
      %p58 = por %p56, %p57
      %p59 = scmp.ne.s32.totalorder %s51, %s53
      %p60 = scmp.eq.s32.totalorder %s22, 1
      %p61 = por %p59, %p60
      %p62 = scmp.ne.s32.totalorder %s53, %s54
      %p63 = scmp.eq.s32.totalorder %s22, 0
      %p64 = por %p62, %p63
      %p65 = scmp.ne.s32.totalorder %s53, %s54
      %p66 = scmp.eq.s32.totalorder %s23, 1
      %p67 = por %p65, %p66
      %p69 = scmp.ne.s32.totalorder %s54, %s68
      %p70 = scmp.eq.s32.totalorder %s23, 0
      %p71 = por %p69, %p70
      %s73 = sadd.s32 %s72, 1
      %p76 = scmp.eq.s32.totalorder %s17, 1
      %p77 = scmp.ne.s32.totalorder %s72, %s74
      %p78 = scmp.eq.s32.totalorder %s17, 0
      %p79 = por %p77, %p78
      %p80 = scmp.ne.s32.totalorder %s72, %s74
      %p81 = scmp.eq.s32.totalorder %s22, 1
      %p82 = por %p80, %p81
      %p83 = scmp.ne.s32.totalorder %s74, %s75
      %p84 = scmp.eq.s32.totalorder %s22, 0
      %p85 = por %p83, %p84
      %p86 = scmp.ne.s32.totalorder %s74, %s75
      %p87 = scmp.eq.s32.totalorder %s23, 1
      %p88 = por %p86, %p87
      %p90 = scmp.ne.s32.totalorder %s75, %s89
      %p91 = scmp.eq.s32.totalorder %s23, 0
      %p92 = por %p90, %p91
      %s94 = sadd.s32 %s93, 1
      %p97 = scmp.eq.s32.totalorder %s17, 1
      %p98 = scmp.ne.s32.totalorder %s93, %s95
      %p99 = scmp.eq.s32.totalorder %s17, 0
      %p100 = por %p98, %p99
      %p101 = scmp.ne.s32.totalorder %s93, %s95
      %p102 = scmp.eq.s32.totalorder %s22, 1
      %p103 = por %p101, %p102
      %p104 = scmp.ne.s32.totalorder %s95, %s96
      %p105 = scmp.eq.s32.totalorder %s22, 0
      %p106 = por %p104, %p105
      %p107 = scmp.ne.s32.totalorder %s95, %s96
      %p108 = scmp.eq.s32.totalorder %s23, 1
      %p109 = por %p107, %p108
      %p111 = scmp.ne.s32.totalorder %s96, %s110
      %p112 = scmp.eq.s32.totalorder %s23, 0
      %p113 = por %p111, %p112
      %s115 = sadd.s32 %s114, 1
      %p118 = scmp.eq.s32.totalorder %s17, 1
      %p119 = scmp.ne.s32.totalorder %s114, %s116
      %p120 = scmp.eq.s32.totalorder %s17, 0
      %p121 = por %p119, %p120
      %p122 = scmp.ne.s32.totalorder %s114, %s116
      %p123 = scmp.eq.s32.totalorder %s22, 1
      %p124 = por %p122, %p123
      %p125 = scmp.ne.s32.totalorder %s116, %s117
      %p126 = scmp.eq.s32.totalorder %s22, 0
      %p127 = por %p125, %p126
      %p128 = scmp.ne.s32.totalorder %s116, %s117
      %p129 = scmp.eq.s32.totalorder %s23, 1
      %p130 = por %p128, %p129
      %p132 = scmp.ne.s32.totalorder %s117, %s131
      %p133 = scmp.eq.s32.totalorder %s23, 0
      %p134 = por %p132, %p133
      %s136 = sadd.s32 %s135, 1
      %p139 = scmp.eq.s32.totalorder %s17, 1
      %p140 = scmp.ne.s32.totalorder %s135, %s137
      %p141 = scmp.eq.s32.totalorder %s17, 0
      %p142 = por %p140, %p141
      %p143 = scmp.ne.s32.totalorder %s135, %s137
      %p144 = scmp.eq.s32.totalorder %s22, 1
      %p145 = por %p143, %p144
      %p146 = scmp.ne.s32.totalorder %s137, %s138
      %p147 = scmp.eq.s32.totalorder %s22, 0
      %p148 = por %p146, %p147
      %p149 = scmp.ne.s32.totalorder %s137, %s138
      %p150 = scmp.eq.s32.totalorder %s23, 1
      %p151 = por %p149, %p150
      %p153 = scmp.ne.s32.totalorder %s138, %s152
      %p154 = scmp.eq.s32.totalorder %s23, 0
      %p155 = por %p153, %p154
      %s156 = ssub.s32 %s17, %s24
      %p157 = scmp.eq.s32.totalorder %s156, 0
      %s159 = sadd.s32 %s158, 1
      %s160 = scalar_select %p157, %s158, %s159
      %p163 = pneg %p157
      %p164 = scmp.eq.s32.totalorder %s17, 1
      %p165 = por %p163, %p164
      %p166 = scmp.ne.s32.totalorder %s158, %s161
      %p167 = scmp.eq.s32.totalorder %s17, 0
      %p168 = por %p166, %p167
      %p169 = scmp.ne.s32.totalorder %s158, %s161
      %p170 = scmp.eq.s32.totalorder %s22, 1
      %p171 = por %p169, %p170
      %p172 = scmp.ne.s32.totalorder %s161, %s162
      %p173 = scmp.eq.s32.totalorder %s22, 0
      %p174 = por %p172, %p173
      %p175 = scmp.ne.s32.totalorder %s161, %s162
      %p176 = scmp.eq.s32.totalorder %s23, 1
      %p177 = por %p175, %p176
      %p179 = scmp.ne.s32.totalorder %s162, %s178
      %p180 = scmp.eq.s32.totalorder %s23, 0
      %p181 = por %p179, %p180
      %p182 = scmp.le.s32.totalorder 1, %s17
      %p183 = scmp.lt.s32.totalorder %s17, 3
      %p184 = pnand %p182, %p183
      %p185 = pneg %p184
      // Predicated region
      $region9: #{tpu_custom_call.1} parent=5 // pred_check
        _
      $region10: #{tpu_custom_call.1} parent=5 // pred_check_branch
        %187 = sbr.rel (%p184) target = $region12
      $region11: #{tpu_custom_call.1} parent=5 // pred_region
        %s188 = ssub.s32 %s17, 1
        // Predicated region
        $region13: #{tpu_custom_call.1} parent=11 // pred_check
          %p189 = pneg %p64
        $region14: #{tpu_custom_call.1} parent=11 // pred_check_branch
          %191 = sbr.rel (%p189) target = $region16
        $region15: #{tpu_custom_call.1} parent=11 // pred_region
          _
        $region16: #{tpu_custom_call.1} parent=11 // pred_fallthru
          _
        // Predicated region
        $region17: #{tpu_custom_call.1} parent=11 // pred_check
          %p192 = pneg %p85
        $region18: #{tpu_custom_call.1} parent=11 // pred_check_branch
          %194 = sbr.rel (%p192) target = $region20
        $region19: #{tpu_custom_call.1} parent=11 // pred_region
          _
        $region20: #{tpu_custom_call.1} parent=11 // pred_fallthru
          _
        // Predicated region
        $region21: #{tpu_custom_call.1} parent=11 // pred_check
          %p195 = pneg %p106
        $region22: #{tpu_custom_call.1} parent=11 // pred_check_branch
          %197 = sbr.rel (%p195) target = $region24
        $region23: #{tpu_custom_call.1} parent=11 // pred_region
          %s199 = ssub.s32 512, 512
          %200 = vsyncadd [#allocation3], %s199
          %s201 = sshll.u32 [#allocation2], 4
          %s202 = int_to_ptr.vmem [resolvable:$true] %s201
          %207 = dma.hbm_to_vmem [thread:$0]  %s3, 512, %s202, [#allocation3], 64, 64, 4
        $region24: #{tpu_custom_call.1} parent=11 // pred_fallthru
          _
        // Predicated region
        $region25: #{tpu_custom_call.1} parent=11 // pred_check
          %p208 = pneg %p127
        $region26: #{tpu_custom_call.1} parent=11 // pred_check_branch
          %210 = sbr.rel (%p208) target = $region28
        $region27: #{tpu_custom_call.1} parent=11 // pred_region
          %s212 = ssub.s32 512, 512
          %213 = vsyncadd [#allocation6], %s212
          %s214 = sshll.u32 [#allocation5], 4
          %s215 = int_to_ptr.vmem [resolvable:$true] %s214
          %220 = dma.hbm_to_vmem [thread:$0]  %s4, 512, %s215, [#allocation6], 64, 64, 4
        $region28: #{tpu_custom_call.1} parent=11 // pred_fallthru
          _
        // Predicated region
        $region29: #{tpu_custom_call.1} parent=11 // pred_check
          %p221 = pneg %p148
        $region30: #{tpu_custom_call.1} parent=11 // pred_check_branch
          %223 = sbr.rel (%p221) target = $region32
        $region31: #{tpu_custom_call.1} parent=11 // pred_region
          _
        $region32: #{tpu_custom_call.1} parent=11 // pred_fallthru
          _
      $region12: #{tpu_custom_call.1} parent=5 // pred_fallthru
        _
      %p224 = scmp.lt.s32.totalorder %s17, 2
      // Predicated region
      $region33: #{tpu_custom_call.1} parent=5 // pred_check
        %p225 = pneg %p224
      $region34: #{tpu_custom_call.1} parent=5 // pred_check_branch
        %227 = sbr.rel (%p225) target = $region36
      $region35: #{tpu_custom_call.1} parent=5 // pred_region
        // Predicated region
        $region37: #{tpu_custom_call.1} parent=35 // pred_check
          %p228 = pneg %p37
        $region38: #{tpu_custom_call.1} parent=35 // pred_check_branch
          %230 = sbr.rel (%p228) target = $region40
        $region39: #{tpu_custom_call.1} parent=35 // pred_region
          %p231 = scmp.lt.s32.totalorder %s17, 1
          %s232 = scalar_select %p231, %s17, 1
          %s233 = smul.addr %s232, 8
          %s234 = smul.addr %s233, 4
          %s235 = scalar_lea.vmem %s0, %s234
        $region40: #{tpu_custom_call.1} parent=35 // pred_fallthru
          _
      $region36: #{tpu_custom_call.1} parent=5 // pred_fallthru
        _
      %p236 = scmp.le.s32.totalorder 1, %s17
      %p237 = scmp.lt.s32.totalorder %s17, 3
      %p238 = pnand %p236, %p237
      %p239 = pneg %p238
      // Predicated region
      $region41: #{tpu_custom_call.1} parent=5 // pred_check
        _
      $region42: #{tpu_custom_call.1} parent=5 // pred_check_branch
        %241 = sbr.rel (%p238) target = $region44
      $region43: #{tpu_custom_call.1} parent=5 // pred_region
        %s242 = ssub.s32 %s17, 1
        // Predicated region
        $region45: #{tpu_custom_call.1} parent=43 // pred_check
          %p243 = pneg %p106
        $region46: #{tpu_custom_call.1} parent=43 // pred_check_branch
          %245 = sbr.rel (%p243) target = $region48
        $region47: #{tpu_custom_call.1} parent=43 // pred_region
          %246 = dma.done [#allocation3], 512
        $region48: #{tpu_custom_call.1} parent=43 // pred_fallthru
          _
        // Predicated region
        $region49: #{tpu_custom_call.1} parent=43 // pred_check
          %p247 = pneg %p127
        $region50: #{tpu_custom_call.1} parent=43 // pred_check_branch
          %249 = sbr.rel (%p247) target = $region52
        $region51: #{tpu_custom_call.1} parent=43 // pred_region
          %250 = dma.done [#allocation6], 512
        $region52: #{tpu_custom_call.1} parent=43 // pred_fallthru
          _
        %p251 = scmp.lt.s32.totalorder %s22, 1
        %s252 = scalar_select %p251, %s22, 1
        %s253 = smul.addr %s252, 8
        %s254 = smul.addr %s253, 4
        %s255 = scalar_lea.vmem %s0, %s254
        %p256 = pneg %p43
        %p257 = pneg %p40
        %p258 = pneg %p64
        %p259 = pneg %p61
        %p260 = pneg %p85
        %p261 = pneg %p82
        %p262 = pneg %p106
        %p263 = pneg %p103
        %p264 = pneg %p127
        %p265 = pneg %p124
        %p266 = pneg %p148
        %p267 = pneg %p145
        %p268 = pneg %p174
        %p269 = pneg %p171
        %s270 = sand.u32 %s161, 1
        %s271 = scalar_lea.sflag [#allocation4], %s270
        %s272 = sand.u32 %s161, 1
        %s273 = smul.addr %s272, 16
        %s274 = scalar_lea.vmem [#allocation7], %s273
        %p275 = scmp.lt.s32.totalorder %s22, 1
        %s276 = scalar_select %p275, %s22, 1
        %s277 = smul.addr %s276, 8
        %s278 = smul.addr %s277, 4
        %s279 = scalar_lea.vmem %s0, %s278
        %v281 = vld [vmem:[%s279] sm:$0xf]
        %v282 = vld [vmem:[%s279 + $0x4] sm:$0xf]
        %v283 = vld [vmem:[%s279 + $0x8] sm:$0xf]
        %v284 = vld [vmem:[%s279 + $0xc] sm:$0xf]
        %v285 = vld [vmem:[%s279 + $0x10] sm:$0xf]
        %v286 = vld [vmem:[%s279 + $0x14] sm:$0xf]
        %v287 = vld [vmem:[%s279 + $0x18] sm:$0xf]
        %v288 = vld [vmem:[%s279 + $0x1c] sm:$0xf]
        %v289 = vld [vmem:[%s1] sm:$0xf]
        %v290 = vld [vmem:[%s1 + $0x4] sm:$0xf]
        %v291 = vld [vmem:[%s1 + $0x8] sm:$0xf]
        %v292 = vld [vmem:[%s1 + $0xc] sm:$0xf]
        %v293 = vld [vmem:[%s1 + $0x10] sm:$0xf]
        %v294 = vld [vmem:[%s1 + $0x14] sm:$0xf]
        %v295 = vld [vmem:[%s1 + $0x18] sm:$0xf]
        %v296 = vld [vmem:[%s1 + $0x1c] sm:$0xf]
        %v305 = vunpack.c.l.b16 %v289
        %v306 = vunpack.c.l.b16 %v290
        %v307 = vunpack.c.l.b16 %v291
        %v308 = vunpack.c.l.b16 %v292
        %v309 = vunpack.c.l.b16 %v293
        %v310 = vunpack.c.l.b16 %v294
        %v311 = vunpack.c.l.b16 %v295
        %v312 = vunpack.c.l.b16 %v296
        %v313 = vpack.c.b16 %v306, %v305
        %v314 = vpack.c.b16 %v308, %v307
        %v315 = vpack.c.b16 %v310, %v309
        %v316 = vpack.c.b16 %v312, %v311
        %v325 = vunpack.c.l.b16 %v281
        %v326 = vunpack.c.l.b16 %v282
        %v327 = vunpack.c.l.b16 %v283
        %v328 = vunpack.c.l.b16 %v284
        %v329 = vunpack.c.l.b16 %v285
        %v330 = vunpack.c.l.b16 %v286
        %v331 = vunpack.c.l.b16 %v287
        %v332 = vunpack.c.l.b16 %v288
        %v333 = vpack.c.b16 %v326, %v325
        %v334 = vpack.c.b16 %v328, %v327
        %v335 = vpack.c.b16 %v330, %v329
        %v336 = vpack.c.b16 %v332, %v331
        %vm341 = vcmask 523264
        %v343 = vsel %vm341, %v313, 0
        %v346 = vsel %vm341, %v314, 0
        %v349 = vsel %vm341, %v315, 0
        %v352 = vsel %vm341, %v316, 0
        %354 = vmatprep.subr.bf16.mxu0 0
        %355 = vmatpush1.bf16.msra.mxu0 %v333
        %356 = vmatprep.subr.bf16.mxu0 0
        %357 = vmatpush1.bf16.msra.mxu0 %v334
        %358 = vmatprep.subr.bf16.mxu0 0
        %359 = vmatpush1.bf16.msra.mxu0 %v335
        %360 = vmatprep.subr.bf16.mxu0 0
        %361 = vmatpush1.bf16.msra.mxu0 %v336
        %362 = vmatprep.subr.bf16.mxu0 0
        %363 = vmatpush1.bf16.msra.mxu0 0
        %364 = vmatprep.subr.bf16.mxu0 0
        %365 = vmatpush1.bf16.msra.mxu0 0
        %366 = vmatprep.subr.bf16.mxu0 0
        %367 = vmatpush1.bf16.msra.mxu0 0
        %368 = vmatprep.subr.bf16.mxu0 0
        %369 = vmatpush1.bf16.msra.mxu0 0
        %370 = vmatprep.subr.bf16.mxu0 0
        %371 = vmatpush1.bf16.msra.mxu0 0
        %372 = vmatprep.subr.bf16.mxu0 0
        %373 = vmatpush1.bf16.msra.mxu0 0
        %374 = vmatprep.subr.bf16.mxu0 0
        %375 = vmatpush1.bf16.msra.mxu0 0
        %376 = vmatprep.subr.bf16.mxu0 0
        %377 = vmatpush1.bf16.msra.mxu0 0
        %378 = vmatprep.subr.bf16.mxu0 0
        %379 = vmatpush1.bf16.msra.mxu0 0
        %380 = vmatprep.subr.bf16.mxu0 0
        %381 = vmatpush1.bf16.msra.mxu0 0
        %382 = vmatprep.subr.bf16.mxu0 0
        %383 = vmatpush1.bf16.msra.mxu0 0
        %384 = vmatprep.subr.bf16.mxu0 0
        %385 = vmatpush1.bf16.msra.mxu0 0
        %386 = vmatprep.mubr.bf16.mxu0 0
        %387 = vmatmul.mubr.bf16.gmra.mrb[0].mxu0 %v343
        %v388 = vpop.f32.mrb[0].mxu0
        %v389 = vadd.f32 0.0, %v388
        %v390 = vpop.f32.mrb[0].mxu0
        %v391 = vpop.f32.mrb[0].mxu0
        %v392 = vadd.f32 0.0, %v391
        %v393 = vpop.f32.mrb[0].mxu0
        %394 = vmatprep.mubr.bf16.mxu0 0
        %395 = vmatmul.mubr.bf16.gmra.mrb[0].mxu0 %v346
        %v396 = vpop.f32.mrb[0].mxu0
        %v397 = vadd.f32 0.0, %v396
        %v398 = vpop.f32.mrb[0].mxu0
        %v399 = vpop.f32.mrb[0].mxu0
        %v400 = vadd.f32 0.0, %v399
        %v401 = vpop.f32.mrb[0].mxu0
        %402 = vmatprep.mubr.bf16.mxu0 0
        %403 = vmatmul.mubr.bf16.gmra.mrb[0].mxu0 %v349
        %v404 = vpop.f32.mrb[0].mxu0
        %v405 = vadd.f32 0.0, %v404
        %v406 = vpop.f32.mrb[0].mxu0
        %v407 = vpop.f32.mrb[0].mxu0
        %v408 = vadd.f32 0.0, %v407
        %v409 = vpop.f32.mrb[0].mxu0
        %410 = vmatprep.mubr.bf16.mxu0 0
        %411 = vmatmul.mubr.bf16.gmra.mrb[0].mxu0 %v352
        %v412 = vpop.f32.mrb[0].mxu0
        %v413 = vadd.f32 0.0, %v412
        %v414 = vpop.f32.mrb[0].mxu0
        %v415 = vpop.f32.mrb[0].mxu0
        %v416 = vadd.f32 0.0, %v415
        %v417 = vpop.f32.mrb[0].mxu0
        %418 = vdwg.mxu0
        %v419 = vld [vmem:[%s2] sm:$0xf]
        %v420 = vld [vmem:[%s2 + $0x4] sm:$0xf]
        %v421 = vld [vmem:[%s2 + $0x8] sm:$0xf]
        %v422 = vld [vmem:[%s2 + $0xc] sm:$0xf]
        %v423 = vld [vmem:[%s2 + $0x10] sm:$0xf]
        %v424 = vld [vmem:[%s2 + $0x14] sm:$0xf]
        %v425 = vld [vmem:[%s2 + $0x18] sm:$0xf]
        %v426 = vld [vmem:[%s2 + $0x1c] sm:$0xf]
        %v435 = vunpack.c.l.b16 %v419
        %v436 = vunpack.c.l.b16 %v420
        %v437 = vunpack.c.l.b16 %v421
        %v438 = vunpack.c.l.b16 %v422
        %v439 = vunpack.c.l.b16 %v423
        %v440 = vunpack.c.l.b16 %v424
        %v441 = vunpack.c.l.b16 %v425
        %v442 = vunpack.c.l.b16 %v426
        %v443 = vpack.c.b16 %v436, %v435
        %v444 = vpack.c.b16 %v438, %v437
        %v445 = vpack.c.b16 %v440, %v439
        %v446 = vpack.c.b16 %v442, %v441
        %v448 = vsel %vm341, %v443, 0
        %v451 = vsel %vm341, %v444, 0
        %v454 = vsel %vm341, %v445, 0
        %v457 = vsel %vm341, %v446, 0
        %459 = vmatprep.subr.bf16.mxu0 0
        %460 = vmatpush1.bf16.msra.mxu0 %v333
        %461 = vmatprep.subr.bf16.mxu0 0
        %462 = vmatpush1.bf16.msra.mxu0 %v334
        %463 = vmatprep.subr.bf16.mxu0 0
        %464 = vmatpush1.bf16.msra.mxu0 %v335
        %465 = vmatprep.subr.bf16.mxu0 0
        %466 = vmatpush1.bf16.msra.mxu0 %v336
        %467 = vmatprep.subr.bf16.mxu0 0
        %468 = vmatpush1.bf16.msra.mxu0 0
        %469 = vmatprep.subr.bf16.mxu0 0
        %470 = vmatpush1.bf16.msra.mxu0 0
        %471 = vmatprep.subr.bf16.mxu0 0
        %472 = vmatpush1.bf16.msra.mxu0 0
        %473 = vmatprep.subr.bf16.mxu0 0
        %474 = vmatpush1.bf16.msra.mxu0 0
        %475 = vmatprep.subr.bf16.mxu0 0
        %476 = vmatpush1.bf16.msra.mxu0 0
        %477 = vmatprep.subr.bf16.mxu0 0
        %478 = vmatpush1.bf16.msra.mxu0 0
        %479 = vmatprep.subr.bf16.mxu0 0
        %480 = vmatpush1.bf16.msra.mxu0 0
        %481 = vmatprep.subr.bf16.mxu0 0
        %482 = vmatpush1.bf16.msra.mxu0 0
        %483 = vmatprep.subr.bf16.mxu0 0
        %484 = vmatpush1.bf16.msra.mxu0 0
        %485 = vmatprep.subr.bf16.mxu0 0
        %486 = vmatpush1.bf16.msra.mxu0 0
        %487 = vmatprep.subr.bf16.mxu0 0
        %488 = vmatpush1.bf16.msra.mxu0 0
        %489 = vmatprep.subr.bf16.mxu0 0
        %490 = vmatpush1.bf16.msra.mxu0 0
        %491 = vmatprep.mubr.bf16.mxu0 0
        %492 = vmatmul.mubr.bf16.gmra.mrb[0].mxu0 %v448
        %v493 = vpop.f32.mrb[0].mxu0
        %v494 = vadd.f32 0.0, %v493
        %v495 = vpop.f32.mrb[0].mxu0
        %v496 = vpop.f32.mrb[0].mxu0
        %v497 = vadd.f32 0.0, %v496
        %v498 = vpop.f32.mrb[0].mxu0
        %499 = vmatprep.mubr.bf16.mxu0 0
        %500 = vmatmul.mubr.bf16.gmra.mrb[0].mxu0 %v451
        %v501 = vpop.f32.mrb[0].mxu0
        %v502 = vadd.f32 0.0, %v501
        %v503 = vpop.f32.mrb[0].mxu0
        %v504 = vpop.f32.mrb[0].mxu0
        %v505 = vadd.f32 0.0, %v504
        %v506 = vpop.f32.mrb[0].mxu0
        %507 = vmatprep.mubr.bf16.mxu0 0
        %508 = vmatmul.mubr.bf16.gmra.mrb[0].mxu0 %v454
        %v509 = vpop.f32.mrb[0].mxu0
        %v510 = vadd.f32 0.0, %v509
        %v511 = vpop.f32.mrb[0].mxu0
        %v512 = vpop.f32.mrb[0].mxu0
        %v513 = vadd.f32 0.0, %v512
        %v514 = vpop.f32.mrb[0].mxu0
        %515 = vmatprep.mubr.bf16.mxu0 0
        %516 = vmatmul.mubr.bf16.gmra.mrb[0].mxu0 %v457
        %v517 = vpop.f32.mrb[0].mxu0
        %v518 = vadd.f32 0.0, %v517
        %v519 = vpop.f32.mrb[0].mxu0
        %v520 = vpop.f32.mrb[0].mxu0
        %v521 = vadd.f32 0.0, %v520
        %v522 = vpop.f32.mrb[0].mxu0
        %523 = vdwg.mxu0
        %v524 = vld [vmem:[#allocation2] sm:$0xf]
        %v525 = vld [vmem:[#allocation2 + $0x4] sm:$0xf]
        %v526 = vld [vmem:[#allocation2 + $0x8] sm:$0xf]
        %v527 = vld [vmem:[#allocation2 + $0xc] sm:$0xf]
        %v528 = vld [vmem:[#allocation2 + $0x10] sm:$0xf]
        %v529 = vld [vmem:[#allocation2 + $0x14] sm:$0xf]
        %v530 = vld [vmem:[#allocation2 + $0x18] sm:$0xf]
        %v531 = vld [vmem:[#allocation2 + $0x1c] sm:$0xf]
        %v540 = vunpack.c.l.b16 %v524
        %v541 = vunpack.c.l.b16 %v525
        %v542 = vunpack.c.l.b16 %v526
        %v543 = vunpack.c.l.b16 %v527
        %v544 = vunpack.c.l.b16 %v528
        %v545 = vunpack.c.l.b16 %v529
        %v546 = vunpack.c.l.b16 %v530
        %v547 = vunpack.c.l.b16 %v531
        %v548 = vpack.c.b16 %v541, %v540
        %v549 = vpack.c.b16 %v543, %v542
        %v550 = vpack.c.b16 %v545, %v544
        %v551 = vpack.c.b16 %v547, %v546
        %v553 = vsel %vm341, %v548, 0
        %v556 = vsel %vm341, %v549, 0
        %v559 = vsel %vm341, %v550, 0
        %v562 = vsel %vm341, %v551, 0
        %564 = vmatprep.subr.bf16.mxu0 0
        %565 = vmatpush1.bf16.msra.mxu0 %v333
        %566 = vmatprep.subr.bf16.mxu0 0
        %567 = vmatpush1.bf16.msra.mxu0 %v334
        %568 = vmatprep.subr.bf16.mxu0 0
        %569 = vmatpush1.bf16.msra.mxu0 %v335
        %570 = vmatprep.subr.bf16.mxu0 0
        %571 = vmatpush1.bf16.msra.mxu0 %v336
        %572 = vmatprep.subr.bf16.mxu0 0
        %573 = vmatpush1.bf16.msra.mxu0 0
        %574 = vmatprep.subr.bf16.mxu0 0
        %575 = vmatpush1.bf16.msra.mxu0 0
        %576 = vmatprep.subr.bf16.mxu0 0
        %577 = vmatpush1.bf16.msra.mxu0 0
        %578 = vmatprep.subr.bf16.mxu0 0
        %579 = vmatpush1.bf16.msra.mxu0 0
        %580 = vmatprep.subr.bf16.mxu0 0
        %581 = vmatpush1.bf16.msra.mxu0 0
        %582 = vmatprep.subr.bf16.mxu0 0
        %583 = vmatpush1.bf16.msra.mxu0 0
        %584 = vmatprep.subr.bf16.mxu0 0
        %585 = vmatpush1.bf16.msra.mxu0 0
        %586 = vmatprep.subr.bf16.mxu0 0
        %587 = vmatpush1.bf16.msra.mxu0 0
        %588 = vmatprep.subr.bf16.mxu0 0
        %589 = vmatpush1.bf16.msra.mxu0 0
        %590 = vmatprep.subr.bf16.mxu0 0
        %591 = vmatpush1.bf16.msra.mxu0 0
        %592 = vmatprep.subr.bf16.mxu0 0
        %593 = vmatpush1.bf16.msra.mxu0 0
        %594 = vmatprep.subr.bf16.mxu0 0
        %595 = vmatpush1.bf16.msra.mxu0 0
        %596 = vmatprep.mubr.bf16.mxu0 0
        %597 = vmatmul.mubr.bf16.gmra.mrb[0].mxu0 %v553
        %v598 = vpop.f32.mrb[0].mxu0
        %v599 = vadd.f32 0.0, %v598
        %v600 = vpop.f32.mrb[0].mxu0
        %v601 = vpop.f32.mrb[0].mxu0
        %v602 = vadd.f32 0.0, %v601
        %v603 = vpop.f32.mrb[0].mxu0
        %604 = vmatprep.mubr.bf16.mxu0 0
        %605 = vmatmul.mubr.bf16.gmra.mrb[0].mxu0 %v556
        %v606 = vpop.f32.mrb[0].mxu0
        %v607 = vadd.f32 0.0, %v606
        %v608 = vpop.f32.mrb[0].mxu0
        %v609 = vpop.f32.mrb[0].mxu0
        %v610 = vadd.f32 0.0, %v609
        %v611 = vpop.f32.mrb[0].mxu0
        %612 = vmatprep.mubr.bf16.mxu0 0
        %613 = vmatmul.mubr.bf16.gmra.mrb[0].mxu0 %v559
        %v614 = vpop.f32.mrb[0].mxu0
        %v615 = vadd.f32 0.0, %v614
        %v616 = vpop.f32.mrb[0].mxu0
        %v617 = vpop.f32.mrb[0].mxu0
        %v618 = vadd.f32 0.0, %v617
        %v619 = vpop.f32.mrb[0].mxu0
        %620 = vmatprep.mubr.bf16.mxu0 0
        %621 = vmatmul.mubr.bf16.gmra.mrb[0].mxu0 %v562
        %v622 = vpop.f32.mrb[0].mxu0
        %v623 = vadd.f32 0.0, %v622
        %v624 = vpop.f32.mrb[0].mxu0
        %v625 = vpop.f32.mrb[0].mxu0
        %v626 = vadd.f32 0.0, %v625
        %v627 = vpop.f32.mrb[0].mxu0
        %628 = vdwg.mxu0
        %v629 = vpack.c.bf16 %v497, %v494
        %v630 = vpack.c.bf16 %v505, %v502
        %v631 = vpack.c.bf16 %v513, %v510
        %v632 = vpack.c.bf16 %v521, %v518
        %v633 = vpack.c.bf16 %v602, %v599
        %v634 = vpack.c.bf16 %v610, %v607
        %v635 = vpack.c.bf16 %v618, %v615
        %v636 = vpack.c.bf16 %v626, %v623
        %637 = vxpose.xlu0.b32.start [1/16] %v389, 128
        %638 = vxpose.xlu0.b32.cont [2/16] %v392, 128
        %639 = vxpose.xlu0.b32.cont [3/16] 0.0, 128
        %640 = vxpose.xlu0.b32.cont [4/16] 0.0, 128
        %641 = vxpose.xlu0.b32.cont [5/16] 0.0, 128
        %642 = vxpose.xlu0.b32.cont [6/16] 0.0, 128
        %643 = vxpose.xlu0.b32.cont [7/16] 0.0, 128
        %644 = vxpose.xlu0.b32.cont [8/16] 0.0, 128
        %645 = vxpose.xlu0.b32.cont [9/16] 0.0, 128
        %646 = vxpose.xlu0.b32.cont [10/16] 0.0, 128
        %647 = vxpose.xlu0.b32.cont [11/16] 0.0, 128
        %648 = vxpose.xlu0.b32.cont [12/16] 0.0, 128
        %649 = vxpose.xlu0.b32.cont [13/16] 0.0, 128
        %650 = vxpose.xlu0.b32.cont [14/16] 0.0, 128
        %651 = vxpose.xlu0.b32.cont [15/16] 0.0, 128
        %652 = vxpose.xlu0.b32.end [16/16] 0.0, 128
        %v653 = vpop.trf.xlu0
        %v654 = vpop.trf.xlu0
        %v655 = vpop.trf.xlu0
        %v656 = vpop.trf.xlu0
        %v657 = vpop.trf.xlu0
        %v658 = vpop.trf.xlu0
        %v659 = vpop.trf.xlu0
        %v660 = vpop.trf.xlu0
        %v661 = vpop.trf.xlu0
        %v662 = vpop.trf.xlu0
        %v663 = vpop.trf.xlu0
        %v664 = vpop.trf.xlu0
        %v665 = vpop.trf.xlu0
        %v666 = vpop.trf.xlu0
        %v667 = vpop.trf.xlu0
        %v668 = vpop.trf.xlu0
        %v669 = vpack.c.bf16 %v654, %v653
        %vm670 = vcmask 130048
        %v672 = vsel %vm670, %v669, 0
        %674 = vmatprep.subr.bf16.mxu0 0
        %675 = vmatpush1.bf16.msra.mxu0 %v629
        %676 = vmatprep.subr.bf16.mxu0 0
        %677 = vmatpush1.bf16.msra.mxu0 0
        %678 = vmatprep.subr.bf16.mxu0 0
        %679 = vmatpush1.bf16.msra.mxu0 0
        %680 = vmatprep.subr.bf16.mxu0 0
        %681 = vmatpush1.bf16.msra.mxu0 0
        %682 = vmatprep.subr.bf16.mxu0 0
        %683 = vmatpush1.bf16.msra.mxu0 0
        %684 = vmatprep.subr.bf16.mxu0 0
        %685 = vmatpush1.bf16.msra.mxu0 0
        %686 = vmatprep.subr.bf16.mxu0 0
        %687 = vmatpush1.bf16.msra.mxu0 0
        %688 = vmatprep.subr.bf16.mxu0 0
        %689 = vmatpush1.bf16.msra.mxu0 0
        %690 = vmatprep.subr.bf16.mxu0 0
        %691 = vmatpush1.bf16.msra.mxu0 0
        %692 = vmatprep.subr.bf16.mxu0 0
        %693 = vmatpush1.bf16.msra.mxu0 0
        %694 = vmatprep.subr.bf16.mxu0 0
        %695 = vmatpush1.bf16.msra.mxu0 0
        %696 = vmatprep.subr.bf16.mxu0 0
        %697 = vmatpush1.bf16.msra.mxu0 0
        %698 = vmatprep.subr.bf16.mxu0 0
        %699 = vmatpush1.bf16.msra.mxu0 0
        %700 = vmatprep.subr.bf16.mxu0 0
        %701 = vmatpush1.bf16.msra.mxu0 0
        %702 = vmatprep.subr.bf16.mxu0 0
        %703 = vmatpush1.bf16.msra.mxu0 0
        %704 = vmatprep.subr.bf16.mxu0 0
        %705 = vmatpush1.bf16.msra.mxu0 0
        %706 = vmatprep.mubr.bf16.mxu0 0
        %707 = vmatmul.mubr.bf16.gmra.mrb[0].mxu0 %v672
        %v708 = vpop.f32.mrb[0].mxu0
        %v709 = vadd.f32 0.0, %v708
        %v710 = vpop.f32.mrb[0].mxu0
        %v711 = vpop.f32.mrb[0].mxu0
        %v712 = vadd.f32 0.0, %v711
        %v713 = vpop.f32.mrb[0].mxu0
        %714 = vdwg.mxu0
        %v715 = vsel %vm670, %v709, -inf
        %716 = vmax.xlane.f32.xlu0 %v715
        %v717 = vpop.xlane.xlu0 %716
        %v718 = vsel %vm670, %v712, -inf
        %719 = vmax.xlane.f32.xlu0 %v718
        %v720 = vpop.xlane.xlu0 %719
        %v721 = vsub.f32 %v709, %v717
        %v722 = vsub.f32 %v712, %v720
        %v723 = vmul.f32 %v721, 1.442695
        %v724 = vpow.pop %v723
        %v725 = vmul.f32 %v722, 1.442695
        %v726 = vpow.pop %v725
        %v727 = vsel %vm670, %v724, 0.0
        %728 = vadd.xlane.f32.xlu0 %v727
        %v729 = vpop.xlane.xlu0 %728
        %v730 = vsel %vm670, %v726, 0.0
        %731 = vadd.xlane.f32.xlu0 %v730
        %v732 = vpop.xlane.xlu0 %731
        %v733 = vpack.c.bf16 %v726, %v724
        %v735 = vsel %vm670, %v733, 0
        %v738 = vsel %vm670, %v633, 0
        %740 = vmatprep.subr.bf16.mxu0 0
        %741 = vmatpush1.bf16.xpose.msra.mxu0 %v738
        %742 = vmatprep.subr.bf16.mxu0 0
        %743 = vmatpush1.bf16.xpose.msra.mxu0 0
        %744 = vmatprep.subr.bf16.mxu0 0
        %745 = vmatpush1.bf16.xpose.msra.mxu0 0
        %746 = vmatprep.subr.bf16.mxu0 0
        %747 = vmatpush1.bf16.xpose.msra.mxu0 0
        %748 = vmatprep.subr.bf16.mxu0 0
        %749 = vmatpush1.bf16.xpose.msra.mxu0 0
        %750 = vmatprep.subr.bf16.mxu0 0
        %751 = vmatpush1.bf16.xpose.msra.mxu0 0
        %752 = vmatprep.subr.bf16.mxu0 0
        %753 = vmatpush1.bf16.xpose.msra.mxu0 0
        %754 = vmatprep.subr.bf16.mxu0 0
        %755 = vmatpush1.bf16.xpose.msra.mxu0 0
        %756 = vmatprep.subr.bf16.mxu0 0
        %757 = vmatpush1.bf16.xpose.msra.mxu0 0
        %758 = vmatprep.subr.bf16.mxu0 0
        %759 = vmatpush1.bf16.xpose.msra.mxu0 0
        %760 = vmatprep.subr.bf16.mxu0 0
        %761 = vmatpush1.bf16.xpose.msra.mxu0 0
        %762 = vmatprep.subr.bf16.mxu0 0
        %763 = vmatpush1.bf16.xpose.msra.mxu0 0
        %764 = vmatprep.subr.bf16.mxu0 0
        %765 = vmatpush1.bf16.xpose.msra.mxu0 0
        %766 = vmatprep.subr.bf16.mxu0 0
        %767 = vmatpush1.bf16.xpose.msra.mxu0 0
        %768 = vmatprep.subr.bf16.mxu0 0
        %769 = vmatpush1.bf16.xpose.msra.mxu0 0
        %770 = vmatprep.subr.bf16.mxu0 0
        %771 = vmatpush1.bf16.xpose.msra.mxu0 0
        %772 = vmatprep.mubr.bf16.mxu0 0
        %773 = vmatmul.mubr.bf16.gmra.mrb[0].mxu0 %v735
        %v774 = vpop.f32.mrb[0].mxu0
        %v775 = vadd.f32 0.0, %v774
        %v776 = vpop.f32.mrb[0].mxu0
        %v777 = vpop.f32.mrb[0].mxu0
        %v778 = vadd.f32 0.0, %v777
        %v779 = vpop.f32.mrb[0].mxu0
        %780 = vdwg.mxu0
        %v781 = vrcp.pop %v729
        %v782 = vrcp.pop %v732
        %v783 = vmul.f32 %v775, %v781
        %v784 = vmul.f32 %v778, %v782
        %v785 = vpack.c.bf16 %v784, %v783
        %v786 = vld [vmem:[#allocation5] sm:$0xf]
        %v787 = vld [vmem:[#allocation5 + $0x4] sm:$0xf]
        %788 = vxpose.xlu0.b32.start [1/16] %v397, 128
        %789 = vxpose.xlu0.b32.cont [2/16] %v400, 128
        %790 = vxpose.xlu0.b32.cont [3/16] 0.0, 128
        %791 = vxpose.xlu0.b32.cont [4/16] 0.0, 128
        %792 = vxpose.xlu0.b32.cont [5/16] 0.0, 128
        %793 = vxpose.xlu0.b32.cont [6/16] 0.0, 128
        %794 = vxpose.xlu0.b32.cont [7/16] 0.0, 128
        %795 = vxpose.xlu0.b32.cont [8/16] 0.0, 128
        %796 = vxpose.xlu0.b32.cont [9/16] 0.0, 128
        %797 = vxpose.xlu0.b32.cont [10/16] 0.0, 128
        %798 = vxpose.xlu0.b32.cont [11/16] 0.0, 128
        %799 = vxpose.xlu0.b32.cont [12/16] 0.0, 128
        %800 = vxpose.xlu0.b32.cont [13/16] 0.0, 128
        %801 = vxpose.xlu0.b32.cont [14/16] 0.0, 128
        %802 = vxpose.xlu0.b32.cont [15/16] 0.0, 128
        %803 = vxpose.xlu0.b32.end [16/16] 0.0, 128
        %v804 = vpop.trf.xlu0
        %v805 = vpop.trf.xlu0
        %v806 = vpop.trf.xlu0
        %v807 = vpop.trf.xlu0
        %v808 = vpop.trf.xlu0
        %v809 = vpop.trf.xlu0
        %v810 = vpop.trf.xlu0
        %v811 = vpop.trf.xlu0
        %v812 = vpop.trf.xlu0
        %v813 = vpop.trf.xlu0
        %v814 = vpop.trf.xlu0
        %v815 = vpop.trf.xlu0
        %v816 = vpop.trf.xlu0
        %v817 = vpop.trf.xlu0
        %v818 = vpop.trf.xlu0
        %v819 = vpop.trf.xlu0
        %v820 = vpack.c.bf16 %v805, %v804
        %v822 = vsel %vm670, %v820, 0
        %824 = vmatprep.subr.bf16.mxu0 0
        %825 = vmatpush1.bf16.msra.mxu0 %v630
        %826 = vmatprep.subr.bf16.mxu0 0
        %827 = vmatpush1.bf16.msra.mxu0 0
        %828 = vmatprep.subr.bf16.mxu0 0
        %829 = vmatpush1.bf16.msra.mxu0 0
        %830 = vmatprep.subr.bf16.mxu0 0
        %831 = vmatpush1.bf16.msra.mxu0 0
        %832 = vmatprep.subr.bf16.mxu0 0
        %833 = vmatpush1.bf16.msra.mxu0 0
        %834 = vmatprep.subr.bf16.mxu0 0
        %835 = vmatpush1.bf16.msra.mxu0 0
        %836 = vmatprep.subr.bf16.mxu0 0
        %837 = vmatpush1.bf16.msra.mxu0 0
        %838 = vmatprep.subr.bf16.mxu0 0
        %839 = vmatpush1.bf16.msra.mxu0 0
        %840 = vmatprep.subr.bf16.mxu0 0
        %841 = vmatpush1.bf16.msra.mxu0 0
        %842 = vmatprep.subr.bf16.mxu0 0
        %843 = vmatpush1.bf16.msra.mxu0 0
        %844 = vmatprep.subr.bf16.mxu0 0
        %845 = vmatpush1.bf16.msra.mxu0 0
        %846 = vmatprep.subr.bf16.mxu0 0
        %847 = vmatpush1.bf16.msra.mxu0 0
        %848 = vmatprep.subr.bf16.mxu0 0
        %849 = vmatpush1.bf16.msra.mxu0 0
        %850 = vmatprep.subr.bf16.mxu0 0
        %851 = vmatpush1.bf16.msra.mxu0 0
        %852 = vmatprep.subr.bf16.mxu0 0
        %853 = vmatpush1.bf16.msra.mxu0 0
        %854 = vmatprep.subr.bf16.mxu0 0
        %855 = vmatpush1.bf16.msra.mxu0 0
        %856 = vmatprep.mubr.bf16.mxu0 0
        %857 = vmatmul.mubr.bf16.gmra.mrb[0].mxu0 %v822
        %v858 = vpop.f32.mrb[0].mxu0
        %v859 = vadd.f32 0.0, %v858
        %v860 = vpop.f32.mrb[0].mxu0
        %v861 = vpop.f32.mrb[0].mxu0
        %v862 = vadd.f32 0.0, %v861
        %v863 = vpop.f32.mrb[0].mxu0
        %864 = vdwg.mxu0
        %v865 = vsel %vm670, %v859, -inf
        %866 = vmax.xlane.f32.xlu0 %v865
        %v867 = vpop.xlane.xlu0 %866
        %v868 = vsel %vm670, %v862, -inf
        %869 = vmax.xlane.f32.xlu0 %v868
        %v870 = vpop.xlane.xlu0 %869
        %v871 = vsub.f32 %v859, %v867
        %v872 = vsub.f32 %v862, %v870
        %v873 = vmul.f32 %v871, 1.442695
        %v874 = vpow.pop %v873
        %v875 = vmul.f32 %v872, 1.442695
        %v876 = vpow.pop %v875
        %v877 = vsel %vm670, %v874, 0.0
        %878 = vadd.xlane.f32.xlu0 %v877
        %v879 = vpop.xlane.xlu0 %878
        %v880 = vsel %vm670, %v876, 0.0
        %881 = vadd.xlane.f32.xlu0 %v880
        %v882 = vpop.xlane.xlu0 %881
        %v883 = vpack.c.bf16 %v876, %v874
        %v885 = vsel %vm670, %v883, 0
        %v888 = vsel %vm670, %v634, 0
        %890 = vmatprep.subr.bf16.mxu0 0
        %891 = vmatpush1.bf16.xpose.msra.mxu0 %v888
        %892 = vmatprep.subr.bf16.mxu0 0
        %893 = vmatpush1.bf16.xpose.msra.mxu0 0
        %894 = vmatprep.subr.bf16.mxu0 0
        %895 = vmatpush1.bf16.xpose.msra.mxu0 0
        %896 = vmatprep.subr.bf16.mxu0 0
        %897 = vmatpush1.bf16.xpose.msra.mxu0 0
        %898 = vmatprep.subr.bf16.mxu0 0
        %899 = vmatpush1.bf16.xpose.msra.mxu0 0
        %900 = vmatprep.subr.bf16.mxu0 0
        %901 = vmatpush1.bf16.xpose.msra.mxu0 0
        %902 = vmatprep.subr.bf16.mxu0 0
        %903 = vmatpush1.bf16.xpose.msra.mxu0 0
        %904 = vmatprep.subr.bf16.mxu0 0
        %905 = vmatpush1.bf16.xpose.msra.mxu0 0
        %906 = vmatprep.subr.bf16.mxu0 0
        %907 = vmatpush1.bf16.xpose.msra.mxu0 0
        %908 = vmatprep.subr.bf16.mxu0 0
        %909 = vmatpush1.bf16.xpose.msra.mxu0 0
        %910 = vmatprep.subr.bf16.mxu0 0
        %911 = vmatpush1.bf16.xpose.msra.mxu0 0
        %912 = vmatprep.subr.bf16.mxu0 0
        %913 = vmatpush1.bf16.xpose.msra.mxu0 0
        %914 = vmatprep.subr.bf16.mxu0 0
        %915 = vmatpush1.bf16.xpose.msra.mxu0 0
        %916 = vmatprep.subr.bf16.mxu0 0
        %917 = vmatpush1.bf16.xpose.msra.mxu0 0
        %918 = vmatprep.subr.bf16.mxu0 0
        %919 = vmatpush1.bf16.xpose.msra.mxu0 0
        %920 = vmatprep.subr.bf16.mxu0 0
        %921 = vmatpush1.bf16.xpose.msra.mxu0 0
        %922 = vmatprep.mubr.bf16.mxu0 0
        %923 = vmatmul.mubr.bf16.gmra.mrb[0].mxu0 %v885
        %v924 = vpop.f32.mrb[0].mxu0
        %v925 = vadd.f32 0.0, %v924
        %v926 = vpop.f32.mrb[0].mxu0
        %v927 = vpop.f32.mrb[0].mxu0
        %v928 = vadd.f32 0.0, %v927
        %v929 = vpop.f32.mrb[0].mxu0
        %930 = vdwg.mxu0
        %v931 = vrcp.pop %v879
        %v932 = vrcp.pop %v882
        %v933 = vmul.f32 %v925, %v931
        %v934 = vmul.f32 %v928, %v932
        %v935 = vpack.c.bf16 %v934, %v933
        %s936 = scalar_lea.vmem [#allocation5], 8
        %v937 = vld [vmem:[%s936] sm:$0xf]
        %v938 = vld [vmem:[%s936 + $0x4] sm:$0xf]
        %v941 = vunpack.c.l.b16 %v937
        %v942 = vunpack.c.l.b16 %v938
        %v943 = vpack.c.b16 %v942, %v941
        %v946 = vsel %vm670, %v935, 0
        %948 = vmatprep.subr.bf16.mxu0 0
        %949 = vmatpush1.bf16.msra.mxu0 %v943
        %950 = vmatprep.subr.bf16.mxu0 0
        %951 = vmatpush1.bf16.msra.mxu0 0
        %952 = vmatprep.subr.bf16.mxu0 0
        %953 = vmatpush1.bf16.msra.mxu0 0
        %954 = vmatprep.subr.bf16.mxu0 0
        %955 = vmatpush1.bf16.msra.mxu0 0
        %956 = vmatprep.subr.bf16.mxu0 0
        %957 = vmatpush1.bf16.msra.mxu0 0
        %958 = vmatprep.subr.bf16.mxu0 0
        %959 = vmatpush1.bf16.msra.mxu0 0
        %960 = vmatprep.subr.bf16.mxu0 0
        %961 = vmatpush1.bf16.msra.mxu0 0
        %962 = vmatprep.subr.bf16.mxu0 0
        %963 = vmatpush1.bf16.msra.mxu0 0
        %964 = vmatprep.subr.bf16.mxu0 0
        %965 = vmatpush1.bf16.msra.mxu0 0
        %966 = vmatprep.subr.bf16.mxu0 0
        %967 = vmatpush1.bf16.msra.mxu0 0
        %968 = vmatprep.subr.bf16.mxu0 0
        %969 = vmatpush1.bf16.msra.mxu0 0
        %970 = vmatprep.subr.bf16.mxu0 0
        %971 = vmatpush1.bf16.msra.mxu0 0
        %972 = vmatprep.subr.bf16.mxu0 0
        %973 = vmatpush1.bf16.msra.mxu0 0
        %974 = vmatprep.subr.bf16.mxu0 0
        %975 = vmatpush1.bf16.msra.mxu0 0
        %976 = vmatprep.subr.bf16.mxu0 0
        %977 = vmatpush1.bf16.msra.mxu0 0
        %978 = vmatprep.subr.bf16.mxu0 0
        %979 = vmatpush1.bf16.msra.mxu0 0
        %980 = vmatprep.mubr.bf16.mxu0 0
        %981 = vmatmul.mubr.bf16.gmra.mrb[0].mxu0 %v946
        %v982 = vpop.f32.mrb[0].mxu0
        %v983 = vadd.f32 0.0, %v982
        %v984 = vpop.f32.mrb[0].mxu0
        %v985 = vpop.f32.mrb[0].mxu0
        %v986 = vadd.f32 0.0, %v985
        %v987 = vpop.f32.mrb[0].mxu0
        %988 = vdwg.mxu0
        %v991 = vunpack.c.l.b16 %v786
        %v992 = vunpack.c.l.b16 %v787
        %v993 = vpack.c.b16 %v992, %v991
        %v996 = vsel %vm670, %v785, 0
        %998 = vmatprep.subr.bf16.mxu0 0
        %999 = vmatpush1.bf16.msra.mxu0 %v993
        %1000 = vmatprep.subr.bf16.mxu0 0
        %1001 = vmatpush1.bf16.msra.mxu0 0
        %1002 = vmatprep.subr.bf16.mxu0 0
        %1003 = vmatpush1.bf16.msra.mxu0 0
        %1004 = vmatprep.subr.bf16.mxu0 0
        %1005 = vmatpush1.bf16.msra.mxu0 0
        %1006 = vmatprep.subr.bf16.mxu0 0
        %1007 = vmatpush1.bf16.msra.mxu0 0
        %1008 = vmatprep.subr.bf16.mxu0 0
        %1009 = vmatpush1.bf16.msra.mxu0 0
        %1010 = vmatprep.subr.bf16.mxu0 0
        %1011 = vmatpush1.bf16.msra.mxu0 0
        %1012 = vmatprep.subr.bf16.mxu0 0
        %1013 = vmatpush1.bf16.msra.mxu0 0
        %1014 = vmatprep.subr.bf16.mxu0 0
        %1015 = vmatpush1.bf16.msra.mxu0 0
        %1016 = vmatprep.subr.bf16.mxu0 0
        %1017 = vmatpush1.bf16.msra.mxu0 0
        %1018 = vmatprep.subr.bf16.mxu0 0
        %1019 = vmatpush1.bf16.msra.mxu0 0
        %1020 = vmatprep.subr.bf16.mxu0 0
        %1021 = vmatpush1.bf16.msra.mxu0 0
        %1022 = vmatprep.subr.bf16.mxu0 0
        %1023 = vmatpush1.bf16.msra.mxu0 0
        %1024 = vmatprep.subr.bf16.mxu0 0
        %1025 = vmatpush1.bf16.msra.mxu0 0
        %1026 = vmatprep.subr.bf16.mxu0 0
        %1027 = vmatpush1.bf16.msra.mxu0 0
        %1028 = vmatprep.subr.bf16.mxu0 0
        %1029 = vmatpush1.bf16.msra.mxu0 0
        %1030 = vmatprep.mubr.bf16.mxu0 0
        %1031 = vmatmul.mubr.bf16.gmra.mrb[0].mxu0 %v996
        %v1032 = vpop.f32.mrb[0].mxu0
        %v1033 = vadd.f32 %v983, %v1032
        %v1034 = vpop.f32.mrb[0].mxu0
        %v1035 = vpop.f32.mrb[0].mxu0
        %v1036 = vadd.f32 %v986, %v1035
        %v1037 = vpop.f32.mrb[0].mxu0
        %1038 = vdwg.mxu0
        %1039 = vxpose.xlu0.b32.start [1/16] %v405, 128
        %1040 = vxpose.xlu0.b32.cont [2/16] %v408, 128
        %1041 = vxpose.xlu0.b32.cont [3/16] 0.0, 128
        %1042 = vxpose.xlu0.b32.cont [4/16] 0.0, 128
        %1043 = vxpose.xlu0.b32.cont [5/16] 0.0, 128
        %1044 = vxpose.xlu0.b32.cont [6/16] 0.0, 128
        %1045 = vxpose.xlu0.b32.cont [7/16] 0.0, 128
        %1046 = vxpose.xlu0.b32.cont [8/16] 0.0, 128
        %1047 = vxpose.xlu0.b32.cont [9/16] 0.0, 128
        %1048 = vxpose.xlu0.b32.cont [10/16] 0.0, 128
        %1049 = vxpose.xlu0.b32.cont [11/16] 0.0, 128
        %1050 = vxpose.xlu0.b32.cont [12/16] 0.0, 128
        %1051 = vxpose.xlu0.b32.cont [13/16] 0.0, 128
        %1052 = vxpose.xlu0.b32.cont [14/16] 0.0, 128
        %1053 = vxpose.xlu0.b32.cont [15/16] 0.0, 128
        %1054 = vxpose.xlu0.b32.end [16/16] 0.0, 128
        %v1055 = vpop.trf.xlu0
        %v1056 = vpop.trf.xlu0
        %v1057 = vpop.trf.xlu0
        %v1058 = vpop.trf.xlu0
        %v1059 = vpop.trf.xlu0
        %v1060 = vpop.trf.xlu0
        %v1061 = vpop.trf.xlu0
        %v1062 = vpop.trf.xlu0
        %v1063 = vpop.trf.xlu0
        %v1064 = vpop.trf.xlu0
        %v1065 = vpop.trf.xlu0
        %v1066 = vpop.trf.xlu0
        %v1067 = vpop.trf.xlu0
        %v1068 = vpop.trf.xlu0
        %v1069 = vpop.trf.xlu0
        %v1070 = vpop.trf.xlu0
        %v1071 = vpack.c.bf16 %v1056, %v1055
        %v1073 = vsel %vm670, %v1071, 0
        %1075 = vmatprep.subr.bf16.mxu0 0
        %1076 = vmatpush1.bf16.msra.mxu0 %v631
        %1077 = vmatprep.subr.bf16.mxu0 0
        %1078 = vmatpush1.bf16.msra.mxu0 0
        %1079 = vmatprep.subr.bf16.mxu0 0
        %1080 = vmatpush1.bf16.msra.mxu0 0
        %1081 = vmatprep.subr.bf16.mxu0 0
        %1082 = vmatpush1.bf16.msra.mxu0 0
        %1083 = vmatprep.subr.bf16.mxu0 0
        %1084 = vmatpush1.bf16.msra.mxu0 0
        %1085 = vmatprep.subr.bf16.mxu0 0
        %1086 = vmatpush1.bf16.msra.mxu0 0
        %1087 = vmatprep.subr.bf16.mxu0 0
        %1088 = vmatpush1.bf16.msra.mxu0 0
        %1089 = vmatprep.subr.bf16.mxu0 0
        %1090 = vmatpush1.bf16.msra.mxu0 0
        %1091 = vmatprep.subr.bf16.mxu0 0
        %1092 = vmatpush1.bf16.msra.mxu0 0
        %1093 = vmatprep.subr.bf16.mxu0 0
        %1094 = vmatpush1.bf16.msra.mxu0 0
        %1095 = vmatprep.subr.bf16.mxu0 0
        %1096 = vmatpush1.bf16.msra.mxu0 0
        %1097 = vmatprep.subr.bf16.mxu0 0
        %1098 = vmatpush1.bf16.msra.mxu0 0
        %1099 = vmatprep.subr.bf16.mxu0 0
        %1100 = vmatpush1.bf16.msra.mxu0 0
        %1101 = vmatprep.subr.bf16.mxu0 0
        %1102 = vmatpush1.bf16.msra.mxu0 0
        %1103 = vmatprep.subr.bf16.mxu0 0
        %1104 = vmatpush1.bf16.msra.mxu0 0
        %1105 = vmatprep.subr.bf16.mxu0 0
        %1106 = vmatpush1.bf16.msra.mxu0 0
        %1107 = vmatprep.mubr.bf16.mxu0 0
        %1108 = vmatmul.mubr.bf16.gmra.mrb[0].mxu0 %v1073
        %v1109 = vpop.f32.mrb[0].mxu0
        %v1110 = vadd.f32 0.0, %v1109
        %v1111 = vpop.f32.mrb[0].mxu0
        %v1112 = vpop.f32.mrb[0].mxu0
        %v1113 = vadd.f32 0.0, %v1112
        %v1114 = vpop.f32.mrb[0].mxu0
        %1115 = vdwg.mxu0
        %v1116 = vsel %vm670, %v1110, -inf
        %1117 = vmax.xlane.f32.xlu0 %v1116
        %v1118 = vpop.xlane.xlu0 %1117
        %v1119 = vsel %vm670, %v1113, -inf
        %1120 = vmax.xlane.f32.xlu0 %v1119
        %v1121 = vpop.xlane.xlu0 %1120
        %v1122 = vsub.f32 %v1110, %v1118
        %v1123 = vsub.f32 %v1113, %v1121
        %v1124 = vmul.f32 %v1122, 1.442695
        %v1125 = vpow.pop %v1124
        %v1126 = vmul.f32 %v1123, 1.442695
        %v1127 = vpow.pop %v1126
        %v1128 = vsel %vm670, %v1125, 0.0
        %1129 = vadd.xlane.f32.xlu0 %v1128
        %v1130 = vpop.xlane.xlu0 %1129
        %v1131 = vsel %vm670, %v1127, 0.0
        %1132 = vadd.xlane.f32.xlu0 %v1131
        %v1133 = vpop.xlane.xlu0 %1132
        %v1134 = vpack.c.bf16 %v1127, %v1125
        %v1136 = vsel %vm670, %v1134, 0
        %v1139 = vsel %vm670, %v635, 0
        %1141 = vmatprep.subr.bf16.mxu0 0
        %1142 = vmatpush1.bf16.xpose.msra.mxu0 %v1139
        %1143 = vmatprep.subr.bf16.mxu0 0
        %1144 = vmatpush1.bf16.xpose.msra.mxu0 0
        %1145 = vmatprep.subr.bf16.mxu0 0
        %1146 = vmatpush1.bf16.xpose.msra.mxu0 0
        %1147 = vmatprep.subr.bf16.mxu0 0
        %1148 = vmatpush1.bf16.xpose.msra.mxu0 0
        %1149 = vmatprep.subr.bf16.mxu0 0
        %1150 = vmatpush1.bf16.xpose.msra.mxu0 0
        %1151 = vmatprep.subr.bf16.mxu0 0
        %1152 = vmatpush1.bf16.xpose.msra.mxu0 0
        %1153 = vmatprep.subr.bf16.mxu0 0
        %1154 = vmatpush1.bf16.xpose.msra.mxu0 0
        %1155 = vmatprep.subr.bf16.mxu0 0
        %1156 = vmatpush1.bf16.xpose.msra.mxu0 0
        %1157 = vmatprep.subr.bf16.mxu0 0
        %1158 = vmatpush1.bf16.xpose.msra.mxu0 0
        %1159 = vmatprep.subr.bf16.mxu0 0
        %1160 = vmatpush1.bf16.xpose.msra.mxu0 0
        %1161 = vmatprep.subr.bf16.mxu0 0
        %1162 = vmatpush1.bf16.xpose.msra.mxu0 0
        %1163 = vmatprep.subr.bf16.mxu0 0
        %1164 = vmatpush1.bf16.xpose.msra.mxu0 0
        %1165 = vmatprep.subr.bf16.mxu0 0
        %1166 = vmatpush1.bf16.xpose.msra.mxu0 0
        %1167 = vmatprep.subr.bf16.mxu0 0
        %1168 = vmatpush1.bf16.xpose.msra.mxu0 0
        %1169 = vmatprep.subr.bf16.mxu0 0
        %1170 = vmatpush1.bf16.xpose.msra.mxu0 0
        %1171 = vmatprep.subr.bf16.mxu0 0
        %1172 = vmatpush1.bf16.xpose.msra.mxu0 0
        %1173 = vmatprep.mubr.bf16.mxu0 0
        %1174 = vmatmul.mubr.bf16.gmra.mrb[0].mxu0 %v1136
        %v1175 = vpop.f32.mrb[0].mxu0
        %v1176 = vadd.f32 0.0, %v1175
        %v1177 = vpop.f32.mrb[0].mxu0
        %v1178 = vpop.f32.mrb[0].mxu0
        %v1179 = vadd.f32 0.0, %v1178
        %v1180 = vpop.f32.mrb[0].mxu0
        %1181 = vdwg.mxu0
        %v1182 = vrcp.pop %v1130
        %v1183 = vrcp.pop %v1133
        %v1184 = vmul.f32 %v1176, %v1182
        %v1185 = vmul.f32 %v1179, %v1183
        %v1186 = vpack.c.bf16 %v1185, %v1184
        %s1187 = scalar_lea.vmem [#allocation5], 16
        %v1188 = vld [vmem:[%s1187] sm:$0xf]
        %v1189 = vld [vmem:[%s1187 + $0x4] sm:$0xf]
        %v1192 = vunpack.c.l.b16 %v1188
        %v1193 = vunpack.c.l.b16 %v1189
        %v1194 = vpack.c.b16 %v1193, %v1192
        %v1197 = vsel %vm670, %v1186, 0
        %1199 = vmatprep.subr.bf16.mxu0 0
        %1200 = vmatpush1.bf16.msra.mxu0 %v1194
        %1201 = vmatprep.subr.bf16.mxu0 0
        %1202 = vmatpush1.bf16.msra.mxu0 0
        %1203 = vmatprep.subr.bf16.mxu0 0
        %1204 = vmatpush1.bf16.msra.mxu0 0
        %1205 = vmatprep.subr.bf16.mxu0 0
        %1206 = vmatpush1.bf16.msra.mxu0 0
        %1207 = vmatprep.subr.bf16.mxu0 0
        %1208 = vmatpush1.bf16.msra.mxu0 0
        %1209 = vmatprep.subr.bf16.mxu0 0
        %1210 = vmatpush1.bf16.msra.mxu0 0
        %1211 = vmatprep.subr.bf16.mxu0 0
        %1212 = vmatpush1.bf16.msra.mxu0 0
        %1213 = vmatprep.subr.bf16.mxu0 0
        %1214 = vmatpush1.bf16.msra.mxu0 0
        %1215 = vmatprep.subr.bf16.mxu0 0
        %1216 = vmatpush1.bf16.msra.mxu0 0
        %1217 = vmatprep.subr.bf16.mxu0 0
        %1218 = vmatpush1.bf16.msra.mxu0 0
        %1219 = vmatprep.subr.bf16.mxu0 0
        %1220 = vmatpush1.bf16.msra.mxu0 0
        %1221 = vmatprep.subr.bf16.mxu0 0
        %1222 = vmatpush1.bf16.msra.mxu0 0
        %1223 = vmatprep.subr.bf16.mxu0 0
        %1224 = vmatpush1.bf16.msra.mxu0 0
        %1225 = vmatprep.subr.bf16.mxu0 0
        %1226 = vmatpush1.bf16.msra.mxu0 0
        %1227 = vmatprep.subr.bf16.mxu0 0
        %1228 = vmatpush1.bf16.msra.mxu0 0
        %1229 = vmatprep.subr.bf16.mxu0 0
        %1230 = vmatpush1.bf16.msra.mxu0 0
        %1231 = vmatprep.mubr.bf16.mxu0 0
        %1232 = vmatmul.mubr.bf16.gmra.mrb[0].mxu0 %v1197
        %v1233 = vpop.f32.mrb[0].mxu0
        %v1234 = vadd.f32 0.0, %v1233
        %v1235 = vpop.f32.mrb[0].mxu0
        %v1236 = vpop.f32.mrb[0].mxu0
        %v1237 = vadd.f32 0.0, %v1236
        %v1238 = vpop.f32.mrb[0].mxu0
        %1239 = vdwg.mxu0
        %v1240 = vadd.f32 %v1033, %v1234
        %v1241 = vadd.f32 %v1036, %v1237
        %1242 = vxpose.xlu0.b32.start [1/16] %v413, 128
        %1243 = vxpose.xlu0.b32.cont [2/16] %v416, 128
        %1244 = vxpose.xlu0.b32.cont [3/16] 0.0, 128
        %1245 = vxpose.xlu0.b32.cont [4/16] 0.0, 128
        %1246 = vxpose.xlu0.b32.cont [5/16] 0.0, 128
        %1247 = vxpose.xlu0.b32.cont [6/16] 0.0, 128
        %1248 = vxpose.xlu0.b32.cont [7/16] 0.0, 128
        %1249 = vxpose.xlu0.b32.cont [8/16] 0.0, 128
        %1250 = vxpose.xlu0.b32.cont [9/16] 0.0, 128
        %1251 = vxpose.xlu0.b32.cont [10/16] 0.0, 128
        %1252 = vxpose.xlu0.b32.cont [11/16] 0.0, 128
        %1253 = vxpose.xlu0.b32.cont [12/16] 0.0, 128
        %1254 = vxpose.xlu0.b32.cont [13/16] 0.0, 128
        %1255 = vxpose.xlu0.b32.cont [14/16] 0.0, 128
        %1256 = vxpose.xlu0.b32.cont [15/16] 0.0, 128
        %1257 = vxpose.xlu0.b32.end [16/16] 0.0, 128
        %v1258 = vpop.trf.xlu0
        %v1259 = vpop.trf.xlu0
        %v1260 = vpop.trf.xlu0
        %v1261 = vpop.trf.xlu0
        %v1262 = vpop.trf.xlu0
        %v1263 = vpop.trf.xlu0
        %v1264 = vpop.trf.xlu0
        %v1265 = vpop.trf.xlu0
        %v1266 = vpop.trf.xlu0
        %v1267 = vpop.trf.xlu0
        %v1268 = vpop.trf.xlu0
        %v1269 = vpop.trf.xlu0
        %v1270 = vpop.trf.xlu0
        %v1271 = vpop.trf.xlu0
        %v1272 = vpop.trf.xlu0
        %v1273 = vpop.trf.xlu0
        %v1274 = vpack.c.bf16 %v1259, %v1258
        %v1276 = vsel %vm670, %v1274, 0
        %1278 = vmatprep.subr.bf16.mxu0 0
        %1279 = vmatpush1.bf16.msra.mxu0 %v632
        %1280 = vmatprep.subr.bf16.mxu0 0
        %1281 = vmatpush1.bf16.msra.mxu0 0
        %1282 = vmatprep.subr.bf16.mxu0 0
        %1283 = vmatpush1.bf16.msra.mxu0 0
        %1284 = vmatprep.subr.bf16.mxu0 0
        %1285 = vmatpush1.bf16.msra.mxu0 0
        %1286 = vmatprep.subr.bf16.mxu0 0
        %1287 = vmatpush1.bf16.msra.mxu0 0
        %1288 = vmatprep.subr.bf16.mxu0 0
        %1289 = vmatpush1.bf16.msra.mxu0 0
        %1290 = vmatprep.subr.bf16.mxu0 0
        %1291 = vmatpush1.bf16.msra.mxu0 0
        %1292 = vmatprep.subr.bf16.mxu0 0
        %1293 = vmatpush1.bf16.msra.mxu0 0
        %1294 = vmatprep.subr.bf16.mxu0 0
        %1295 = vmatpush1.bf16.msra.mxu0 0
        %1296 = vmatprep.subr.bf16.mxu0 0
        %1297 = vmatpush1.bf16.msra.mxu0 0
        %1298 = vmatprep.subr.bf16.mxu0 0
        %1299 = vmatpush1.bf16.msra.mxu0 0
        %1300 = vmatprep.subr.bf16.mxu0 0
        %1301 = vmatpush1.bf16.msra.mxu0 0
        %1302 = vmatprep.subr.bf16.mxu0 0
        %1303 = vmatpush1.bf16.msra.mxu0 0
        %1304 = vmatprep.subr.bf16.mxu0 0
        %1305 = vmatpush1.bf16.msra.mxu0 0
        %1306 = vmatprep.subr.bf16.mxu0 0
        %1307 = vmatpush1.bf16.msra.mxu0 0
        %1308 = vmatprep.subr.bf16.mxu0 0
        %1309 = vmatpush1.bf16.msra.mxu0 0
        %1310 = vmatprep.mubr.bf16.mxu0 0
        %1311 = vmatmul.mubr.bf16.gmra.mrb[0].mxu0 %v1276
        %v1312 = vpop.f32.mrb[0].mxu0
        %v1313 = vadd.f32 0.0, %v1312
        %v1314 = vpop.f32.mrb[0].mxu0
        %v1315 = vpop.f32.mrb[0].mxu0
        %v1316 = vadd.f32 0.0, %v1315
        %v1317 = vpop.f32.mrb[0].mxu0
        %1318 = vdwg.mxu0
        %v1319 = vsel %vm670, %v1313, -inf
        %1320 = vmax.xlane.f32.xlu0 %v1319
        %v1321 = vpop.xlane.xlu0 %1320
        %v1322 = vsel %vm670, %v1316, -inf
        %1323 = vmax.xlane.f32.xlu0 %v1322
        %v1324 = vpop.xlane.xlu0 %1323
        %v1325 = vsub.f32 %v1313, %v1321
        %v1326 = vsub.f32 %v1316, %v1324
        %v1327 = vmul.f32 %v1325, 1.442695
        %v1328 = vpow.pop %v1327
        %v1329 = vmul.f32 %v1326, 1.442695
        %v1330 = vpow.pop %v1329
        %v1331 = vsel %vm670, %v1328, 0.0
        %1332 = vadd.xlane.f32.xlu0 %v1331
        %v1333 = vpop.xlane.xlu0 %1332
        %v1334 = vsel %vm670, %v1330, 0.0
        %1335 = vadd.xlane.f32.xlu0 %v1334
        %v1336 = vpop.xlane.xlu0 %1335
        %v1337 = vpack.c.bf16 %v1330, %v1328
        %v1339 = vsel %vm670, %v1337, 0
        %v1342 = vsel %vm670, %v636, 0
        %1344 = vmatprep.subr.bf16.mxu0 0
        %1345 = vmatpush1.bf16.xpose.msra.mxu0 %v1342
        %1346 = vmatprep.subr.bf16.mxu0 0
        %1347 = vmatpush1.bf16.xpose.msra.mxu0 0
        %1348 = vmatprep.subr.bf16.mxu0 0
        %1349 = vmatpush1.bf16.xpose.msra.mxu0 0
        %1350 = vmatprep.subr.bf16.mxu0 0
        %1351 = vmatpush1.bf16.xpose.msra.mxu0 0
        %1352 = vmatprep.subr.bf16.mxu0 0
        %1353 = vmatpush1.bf16.xpose.msra.mxu0 0
        %1354 = vmatprep.subr.bf16.mxu0 0
        %1355 = vmatpush1.bf16.xpose.msra.mxu0 0
        %1356 = vmatprep.subr.bf16.mxu0 0
        %1357 = vmatpush1.bf16.xpose.msra.mxu0 0
        %1358 = vmatprep.subr.bf16.mxu0 0
        %1359 = vmatpush1.bf16.xpose.msra.mxu0 0
        %1360 = vmatprep.subr.bf16.mxu0 0
        %1361 = vmatpush1.bf16.xpose.msra.mxu0 0
        %1362 = vmatprep.subr.bf16.mxu0 0
        %1363 = vmatpush1.bf16.xpose.msra.mxu0 0
        %1364 = vmatprep.subr.bf16.mxu0 0
        %1365 = vmatpush1.bf16.xpose.msra.mxu0 0
        %1366 = vmatprep.subr.bf16.mxu0 0
        %1367 = vmatpush1.bf16.xpose.msra.mxu0 0
        %1368 = vmatprep.subr.bf16.mxu0 0
        %1369 = vmatpush1.bf16.xpose.msra.mxu0 0
        %1370 = vmatprep.subr.bf16.mxu0 0
        %1371 = vmatpush1.bf16.xpose.msra.mxu0 0
        %1372 = vmatprep.subr.bf16.mxu0 0
        %1373 = vmatpush1.bf16.xpose.msra.mxu0 0
        %1374 = vmatprep.subr.bf16.mxu0 0
        %1375 = vmatpush1.bf16.xpose.msra.mxu0 0
        %1376 = vmatprep.mubr.bf16.mxu0 0
        %1377 = vmatmul.mubr.bf16.gmra.mrb[0].mxu0 %v1339
        %v1378 = vpop.f32.mrb[0].mxu0
        %v1379 = vadd.f32 0.0, %v1378
        %v1380 = vpop.f32.mrb[0].mxu0
        %v1381 = vpop.f32.mrb[0].mxu0
        %v1382 = vadd.f32 0.0, %v1381
        %v1383 = vpop.f32.mrb[0].mxu0
        %1384 = vdwg.mxu0
        %v1385 = vrcp.pop %v1333
        %v1386 = vrcp.pop %v1336
        %v1387 = vmul.f32 %v1379, %v1385
        %v1388 = vmul.f32 %v1382, %v1386
        %v1389 = vpack.c.bf16 %v1388, %v1387
        %s1390 = scalar_lea.vmem [#allocation5], 24
        %v1391 = vld [vmem:[%s1390] sm:$0xf]
        %v1392 = vld [vmem:[%s1390 + $0x4] sm:$0xf]
        %v1395 = vunpack.c.l.b16 %v1391
        %v1396 = vunpack.c.l.b16 %v1392
        %v1397 = vpack.c.b16 %v1396, %v1395
        %v1400 = vsel %vm670, %v1389, 0
        %1402 = vmatprep.subr.bf16.mxu0 0
        %1403 = vmatpush1.bf16.msra.mxu0 %v1397
        %1404 = vmatprep.subr.bf16.mxu0 0
        %1405 = vmatpush1.bf16.msra.mxu0 0
        %1406 = vmatprep.subr.bf16.mxu0 0
        %1407 = vmatpush1.bf16.msra.mxu0 0
        %1408 = vmatprep.subr.bf16.mxu0 0
        %1409 = vmatpush1.bf16.msra.mxu0 0
        %1410 = vmatprep.subr.bf16.mxu0 0
        %1411 = vmatpush1.bf16.msra.mxu0 0
        %1412 = vmatprep.subr.bf16.mxu0 0
        %1413 = vmatpush1.bf16.msra.mxu0 0
        %1414 = vmatprep.subr.bf16.mxu0 0
        %1415 = vmatpush1.bf16.msra.mxu0 0
        %1416 = vmatprep.subr.bf16.mxu0 0
        %1417 = vmatpush1.bf16.msra.mxu0 0
        %1418 = vmatprep.subr.bf16.mxu0 0
        %1419 = vmatpush1.bf16.msra.mxu0 0
        %1420 = vmatprep.subr.bf16.mxu0 0
        %1421 = vmatpush1.bf16.msra.mxu0 0
        %1422 = vmatprep.subr.bf16.mxu0 0
        %1423 = vmatpush1.bf16.msra.mxu0 0
        %1424 = vmatprep.subr.bf16.mxu0 0
        %1425 = vmatpush1.bf16.msra.mxu0 0
        %1426 = vmatprep.subr.bf16.mxu0 0
        %1427 = vmatpush1.bf16.msra.mxu0 0
        %1428 = vmatprep.subr.bf16.mxu0 0
        %1429 = vmatpush1.bf16.msra.mxu0 0
        %1430 = vmatprep.subr.bf16.mxu0 0
        %1431 = vmatpush1.bf16.msra.mxu0 0
        %1432 = vmatprep.subr.bf16.mxu0 0
        %1433 = vmatpush1.bf16.msra.mxu0 0
        %1434 = vmatprep.mubr.bf16.mxu0 0
        %1435 = vmatmul.mubr.bf16.gmra.mrb[0].mxu0 %v1400
        %v1436 = vpop.f32.mrb[0].mxu0
        %v1437 = vadd.f32 0.0, %v1436
        %v1438 = vpop.f32.mrb[0].mxu0
        %v1439 = vpop.f32.mrb[0].mxu0
        %v1440 = vadd.f32 0.0, %v1439
        %v1441 = vpop.f32.mrb[0].mxu0
        %1442 = vdwg.mxu0
        %v1443 = vadd.f32 %v1240, %v1437
        %v1444 = vadd.f32 %v1241, %v1440
        %v1445 = vld [vmem:[%s5] sm:$0x1]
        %v1447 = vlaneseq
        %v1448 = vshrl.u32 %v1447, 7
        %v1449 = vsub.s32 0, %v1448
        %v1450 = vrot.slane %v1445, %v1449
        %v1452 = vadd.f32 %v1443, %v1450
        %v1453 = vadd.f32 %v1444, %v1450
        %1454 = vst.msk [vmem:[%s274] sm:$0xff] %vm341, %v1452
        %1455 = vst.msk [vmem:[%s274 + $0x8] sm:$0xff] %vm341, %v1453
        %s1456 = sand.u32 %s161, 1
        %s1457 = scalar_lea.sflag [#allocation4], %s1456
        %s1458 = sand.u32 %s161, 1
        %s1459 = smul.addr %s1458, 16
        %s1460 = scalar_lea.vmem [#allocation7], %s1459
        // Predicated region
        $region53: #{tpu_custom_call.1} parent=43 // pred_check
          %p1461 = pneg %p171
        $region54: #{tpu_custom_call.1} parent=43 // pred_check_branch
          %1463 = sbr.rel (%p1461) target = $region56
        $region55: #{tpu_custom_call.1} parent=43 // pred_region
          %s1465 = ssub.s32 256, 256
          %1466 = vsyncadd %s1457, %s1465
          %s1467 = smul.addr %s22, 2
          %s1468 = smul.addr %s1467, 128
          %s1469 = scalar_lea.hbm %s6, %s1468
          %s1470 = sshll.u32 %s1460, 4
          %s1471 = int_to_ptr.vmem [resolvable:$true] %s1470
          %1476 = dma.vmem_to_hbm [thread:$0]  %s1471, 256, %s1469, %s1457, 128, 128, 8
        $region56: #{tpu_custom_call.1} parent=43 // pred_fallthru
          _
      $region44: #{tpu_custom_call.1} parent=5 // pred_fallthru
        _
      %p1477 = scmp.le.s32.totalorder 2, %s17
      // Predicated region
      $region57: #{tpu_custom_call.1} parent=5 // pred_check
        %p1478 = pneg %p1477
      $region58: #{tpu_custom_call.1} parent=5 // pred_check_branch
        %1480 = sbr.rel (%p1478) target = $region60
      $region59: #{tpu_custom_call.1} parent=5 // pred_region
        %s1481 = ssub.s32 %s17, 2
        // Predicated region
        $region61: #{tpu_custom_call.1} parent=59 // pred_check
          %p1482 = pneg %p177
        $region62: #{tpu_custom_call.1} parent=59 // pred_check_branch
          %1484 = sbr.rel (%p1482) target = $region64
        $region63: #{tpu_custom_call.1} parent=59 // pred_region
          %s1485 = sand.u32 %s162, 1
          %s1486 = scalar_lea.sflag [#allocation4], %s1485
          %s1487 = sand.u32 %s162, 1
          %s1488 = smul.addr %s1487, 16
          %s1489 = scalar_lea.vmem [#allocation7], %s1488
          %1490 = dma.done %s1486, 256
        $region64: #{tpu_custom_call.1} parent=59 // pred_fallthru
          _
      $region60: #{tpu_custom_call.1} parent=5 // pred_fallthru
        _
    $region6: #{tpu_custom_call.1} parent=1 // loop_footer
      %s21 = sadd.s32 1, %s17
    $region7: #{tpu_custom_call.1} parent=1 // loop_footer_branch
      %16 = sbr.rel target = $region3
    $region8: #{tpu_custom_call.1} parent=1 // loop_exit
      _
    %1491 = vsyncpa [#allocation3], 1
    %s1492 = scalar_lea.sflag [#allocation3], 1
    %1493 = vsyncpa %s1492, 1
    %1494 = vsyncpa [#allocation6], 1
    %1495 = vsyncpa [#allocation4], 1
    %s1496 = scalar_lea.sflag [#allocation4], 1
    %1497 = vsyncpa %s1496, 1

</llo_original>
